<compile_context>
chip_gen: v6e
topology: v6e:2x2x1
jax: 0.10.0
libtpu: 0.0.40
codegen_flags: <defaults>
</compile_context>

<pallas_src>
import functools

import jax
import jax.numpy as jnp
from jax import lax
from jax.experimental import pallas as pl
from jax.experimental.pallas import tpu as pltpu

BN_EPS = 1e-5
_VMEM_LIMIT_BYTES = 32 * 1024 * 1024      # tiles are budgeted well below this
_SLAB_BYTE_BUDGET = 2 * 1024 * 1024       # per-tile input slab target size


# ------------------------------ kernels --------------------------------------
def _conv_patches(slab_ref, th, w, cin):
    """Build the (th*w, 9*cin) im2col operand for one halo row-slab.

    slab_ref: (th+2, w+2, cin) VMEM block of the zero-padded input.  The 9
    shifted 3x3 tap windows are concatenated along channels so the whole 3x3
    conv is a single MXU matmul with K = 9*cin (instead of 9 dots with K=cin).
    """
    cols = [slab_ref[dy:dy + th, dx:dx + w, :]
            for dy in range(3) for dx in range(3)]
    xcat = jnp.concatenate(cols, axis=-1)               # (th, w, 9*cin)
    return xcat.reshape(th * w, 9 * cin)


def _stats_kernel(slab_ref, w3_ref, stat_ref, *, th, w, cin):
    """Pass 1: raw (bias-free) fused 3x3 conv -> per-tile channel sum / sumsq."""
    x2d = _conv_patches(slab_ref, th, w, cin)
    y = jnp.dot(x2d, w3_ref[...], preferred_element_type=jnp.float32)
    stat_ref[0:1, :] = jnp.sum(y, axis=0, keepdims=True)
    stat_ref[1:2, :] = jnp.sum(y * y, axis=0, keepdims=True)


def _apply_kernel(slab_ref, w3_ref, w1_ref, beff_ref, out_ref, *, th, w, cin):
    """Pass 2: raw conv -> folded (BN + both 1x1 convs + biases) -> + residual."""
    x2d = _conv_patches(slab_ref, th, w, cin)
    raw = jnp.dot(x2d, w3_ref[...], preferred_element_type=jnp.float32)
    z = jnp.dot(raw.astype(w1_ref.dtype), w1_ref[...],
                preferred_element_type=jnp.float32)      # (th*w, Cout)
    # Residual = centre tap of the slab (Cin == Cout); no extra input needed.
    res = slab_ref[1:1 + th, 1:1 + w, :].reshape(th * w, cin).astype(jnp.float32)
    # NOTE: for small Cout the output store is lane-sparse; padding Cout toward
    # 128 lanes (or folding W into the lane dim) is a further optimization.
    out_ref[...] = (z + beff_ref[...] + res).astype(out_ref.dtype)


# ------------------------------ wrapper ---------------------------------------
def _pick_tile_h(h, w, cin, itemsize):
    """Largest divisor of H whose padded slab stays under the VMEM tile budget."""
    best = 1
    for th in range(1, h + 1):
        if h % th:
            continue
        if (th + 2) * (w + 2) * cin * itemsize <= _SLAB_BYTE_BUDGET:
            best = th
    return best


@functools.partial(jax.jit, static_argnames=("compute_dtype", "tile_h"))
def block_forward(x_nchw, params, *, compute_dtype=jnp.float32, tile_h=None):
    """Block forward (training path). x_nchw: (B, Cin, H, W) f32 -> (B, Cout, H, W)."""
    (w3a, b3a, ga, bea, w1a, c1a,
     w3b, b3b, gb, beb, w1b, c1b) = params

    B, Cin, H, W = x_nchw.shape
    Cmid = w3a.shape[-1]
    Cout = w1a.shape[-1]
    C2 = 2 * Cmid
    assert Cin == Cout, "residual add requires in_channels == out_channels"

    if tile_h is None:
        tile_h = _pick_tile_h(H, W, Cin, jnp.dtype(compute_dtype).itemsize)
    if H % tile_h:
        raise ValueError(f"tile_h={tile_h} must divide H={H}")
    TH = tile_h
    R = H // TH
    N = B * H * W

    # ---- glue: NCHW -> NHWC, zero-pad, halo row-slabs (no 9x im2col) ---------
    x_nhwc = jnp.transpose(x_nchw, (0, 2, 3, 1))                   # (B,H,W,Cin)
    xpad = jnp.pad(x_nhwc, ((0, 0), (1, 1), (1, 1), (0, 0)))        # (B,H+2,W+2,Cin)
    slabs = jnp.stack([xpad[:, r * TH:r * TH + TH + 2] for r in range(R)],
                      axis=1).astype(compute_dtype)                 # (B,R,TH+2,W+2,Cin)

    # ---- glue: fuse the two branches' weights --------------------------------
    w3_c = jnp.concatenate([w3a, w3b], axis=-1).reshape(9 * Cin, C2)
    w3_c = w3_c.astype(compute_dtype)                               # (9*Cin, 2*Cmid)
    gamma = jnp.concatenate([ga.reshape(-1), gb.reshape(-1)])
    beta = jnp.concatenate([bea.reshape(-1), beb.reshape(-1)])
    w1_st = jnp.concatenate([w1a, w1b], axis=0)                     # (2*Cmid, Cout)
    c1_sum = c1a.reshape(-1) + c1b.reshape(-1)                      # (Cout,)
    # The 3x3 conv biases cancel inside BatchNorm (constant per-channel shift),
    # so they never enter the kernels.

    slab_spec = pl.BlockSpec((None, None, TH + 2, W + 2, Cin),
                             lambda b, r: (b, r, 0, 0, 0))
    w3_spec = pl.BlockSpec((9 * Cin, C2), lambda b, r: (0, 0))
    cparams = pltpu.CompilerParams(
        dimension_semantics=("parallel", "parallel"),
        vmem_limit_bytes=_VMEM_LIMIT_BYTES)

    # ---- pass 1: per-tile partial BN statistics ------------------------------
    stats = pl.pallas_call(
        functools.partial(_stats_kernel, th=TH, w=W, cin=Cin),
        out_shape=jax.ShapeDtypeStruct((B, R, 2, C2), jnp.float32),
        grid=(B, R),
        in_specs=[slab_spec, w3_spec],
        out_specs=pl.BlockSpec((None, None, 2, C2), lambda b, r: (b, r, 0, 0)),
        compiler_params=cparams,
    )(slabs, w3_c)

    # ---- glue: global BN stats; fold BN affine + 1x1 convs + biases ----------
    s = jnp.sum(stats, axis=(0, 1))                                 # (2, C2) f32
    mean = s[0] / N
    var = jnp.maximum(s[1] / N - mean * mean, 0.0)                  # biased variance
    scale = gamma * lax.rsqrt(var + BN_EPS)
    shift = beta - mean * scale
    w1_eff = (scale[:, None] * w1_st).astype(compute_dtype)         # (2*Cmid, Cout)
    b_eff = (shift @ w1_st + c1_sum).reshape(1, Cout).astype(jnp.float32)

    # ---- pass 2: conv + folded BN/1x1 + residual ------------------------------
    out = pl.pallas_call(
        functools.partial(_apply_kernel, th=TH, w=W, cin=Cin),
        out_shape=jax.ShapeDtypeStruct((B, R, TH * W, Cout), jnp.float32),
        grid=(B, R),
        in_specs=[slab_spec, w3_spec,
                  pl.BlockSpec((C2, Cout), lambda b, r: (0, 0)),
                  pl.BlockSpec((1, Cout), lambda b, r: (0, 0))],
        out_specs=pl.BlockSpec((None, None, TH * W, Cout),
                               lambda b, r: (b, r, 0, 0)),
        compiler_params=cparams,
    )(slabs, w3_c, w1_eff, b_eff)

    out_nhwc = out.reshape(B, H, W, Cout)
    return jnp.transpose(out_nhwc, (0, 3, 1, 2))                    # back to NCHW


# ---------------------------- pure-JAX reference -----------------------------
def block_reference(x_nchw, params):
    (w3a, b3a, ga, bea, w1a, c1a,
     w3b, b3b, gb, beb, w1b, c1b) = params
    x = jnp.transpose(x_nchw, (0, 2, 3, 1))

    def branch(w3_hwio, b3, g, be, w1, c1):
        y = lax.conv_general_dilated(
            x, w3_hwio, window_strides=(1, 1), padding="SAME",
            dimension_numbers=("NHWC", "HWIO", "NHWC")) + b3.reshape(-1)
        m = jnp.mean(y, axis=(0, 1, 2))
        v = jnp.mean((y - m) ** 2, axis=(0, 1, 2))
        y_hat = (y - m) * lax.rsqrt(v + BN_EPS)
        y_bn = y_hat * g.reshape(-1) + be.reshape(-1)
        return jnp.einsum("bhwm,mo->bhwo", y_bn, w1) + c1.reshape(-1)

    out = (branch(w3a, b3a, ga, bea, w1a, c1a)
           + branch(w3b, b3b, gb, beb, w1b, c1b) + x)
    return jnp.transpose(out, (0, 3, 1, 2))


# ------------------------------- param init ----------------------------------
def init_params(key, cin, cmid, cout):
    k1, k2, k3, k4 = jax.random.split(key, 4)
    # kaiming_normal_(mode='fan_out'): std = sqrt(2 / (cout * kh * kw))
    std3 = (2.0 / (cmid * 3 * 3)) ** 0.5
    std1 = (2.0 / (cout * 1 * 1)) ** 0.5
    w3a = jax.random.normal(k1, (3, 3, cin, cmid), jnp.float32) * std3  # HWIO
    w3b = jax.random.normal(k2, (3, 3, cin, cmid), jnp.float32) * std3
    w1a = jax.random.normal(k3, (cmid, cout), jnp.float32) * std1
    w1b = jax.random.normal(k4, (cmid, cout), jnp.float32) * std1
    b3a = jnp.zeros((1, cmid), jnp.float32)   # conv biases init to 0
    b3b = jnp.zeros((1, cmid), jnp.float32)
    c1a = jnp.zeros((1, cout), jnp.float32)
    c1b = jnp.zeros((1, cout), jnp.float32)
    ga = jnp.ones((1, cmid), jnp.float32)     # BN gamma = 1
    gb = jnp.ones((1, cmid), jnp.float32)
    bea = jnp.zeros((1, cmid), jnp.float32)   # BN beta = 0
    beb = jnp.zeros((1, cmid), jnp.float32)
    return (w3a, b3a, ga, bea, w1a, c1a,
            w3b, b3b, gb, beb, w1b, c1b)


if __name__ == "__main__":
    B, Cin, Cmid, Cout, H, W = 2, 4, 8, 4, 16, 16
    key = jax.random.PRNGKey(0)
    kx, kp = jax.random.split(key)
    x = jax.random.normal(kx, (B, Cin, H, W), jnp.float32)
    params = init_params(kp, Cin, Cmid, Cout)

    ref = jax.block_until_ready(block_reference(x, params))

    # f32 MXU operands, forced 2x2 (batch x row-block) grid: exercises tiling.
    out = jax.block_until_ready(block_forward(x, params, tile_h=8))
    assert out.shape == (B, Cout, H, W)
    assert jnp.allclose(out, ref, atol=1e-3, rtol=1e-3), (
        float(jnp.max(jnp.abs(out - ref))))

    # bf16 MXU-operand fast path (v6e/v7x), auto-picked tile: loose sanity check.
    out_bf16 = jax.block_until_ready(
        block_forward(x, params, compute_dtype=jnp.bfloat16))
    assert jnp.allclose(out_bf16, ref, atol=2.5e-1, rtol=5e-2), (
        float(jnp.max(jnp.abs(out_bf16 - ref))))

    print("KERNEL_OK")
</pallas_src>

<mosaic_0001>
module attributes {stable_mosaic.version = 11 : i64} {
  func.func @_stats_kernel(%arg0: i32, %arg1: i32, %arg2: memref<1x1x10x18x4xf32, #tpu.memory_space<vmem>>, %arg3: memref<36x16xf32, #tpu.memory_space<vmem>>, %arg4: memref<1x1x2x16xf32, #tpu.memory_space<vmem>>) attributes {dimension_semantics = [#tpu.dimension_semantics<parallel>, #tpu.dimension_semantics<parallel>], iteration_bounds = array<i64: 2, 2>, scalar_prefetch = 0 : i64, scratch_operands = 0 : i64, tpu.core_type = #tpu.core_type<tc>, window_params = [{transform_indices = @transform_0, window_bounds = array<i64: 1, 1, 10, 18, 4>}, {pipeline_mode = #tpu.pipeline_mode<synchronous>, transform_indices = @transform_1, window_bounds = array<i64: 36, 16>}, {transform_indices = @transform_2, window_bounds = array<i64: 1, 1, 2, 16>}]} {
    %c0 = arith.constant 0 : index
    %c0_0 = arith.constant 0 : index
    %c0_1 = arith.constant 0 : index
    %c0_2 = arith.constant 0 : index
    %c0_3 = arith.constant 0 : index
    %0 = vector.load %arg2[%c0, %c0_0, %c0_1, %c0_2, %c0_3] : memref<1x1x10x18x4xf32, #tpu.memory_space<vmem>>, vector<1x1x8x16x4xf32>
    %1 = vector.shape_cast %0 : vector<1x1x8x16x4xf32> to vector<8x16x4xf32>
    %c0_4 = arith.constant 0 : index
    %c0_5 = arith.constant 0 : index
    %c0_6 = arith.constant 0 : index
    %c1 = arith.constant 1 : index
    %c0_7 = arith.constant 0 : index
    %2 = vector.load %arg2[%c0_4, %c0_5, %c0_6, %c1, %c0_7] : memref<1x1x10x18x4xf32, #tpu.memory_space<vmem>>, vector<1x1x8x16x4xf32>
    %3 = vector.shape_cast %2 : vector<1x1x8x16x4xf32> to vector<8x16x4xf32>
    %c0_8 = arith.constant 0 : index
    %c0_9 = arith.constant 0 : index
    %c0_10 = arith.constant 0 : index
    %c2 = arith.constant 2 : index
    %c0_11 = arith.constant 0 : index
    %4 = vector.load %arg2[%c0_8, %c0_9, %c0_10, %c2, %c0_11] : memref<1x1x10x18x4xf32, #tpu.memory_space<vmem>>, vector<1x1x8x16x4xf32>
    %5 = vector.shape_cast %4 : vector<1x1x8x16x4xf32> to vector<8x16x4xf32>
    %c0_12 = arith.constant 0 : index
    %c0_13 = arith.constant 0 : index
    %c1_14 = arith.constant 1 : index
    %c0_15 = arith.constant 0 : index
    %c0_16 = arith.constant 0 : index
    %6 = vector.load %arg2[%c0_12, %c0_13, %c1_14, %c0_15, %c0_16] : memref<1x1x10x18x4xf32, #tpu.memory_space<vmem>>, vector<1x1x8x16x4xf32>
    %7 = vector.shape_cast %6 : vector<1x1x8x16x4xf32> to vector<8x16x4xf32>
    %c0_17 = arith.constant 0 : index
    %c0_18 = arith.constant 0 : index
    %c1_19 = arith.constant 1 : index
    %c1_20 = arith.constant 1 : index
    %c0_21 = arith.constant 0 : index
    %8 = vector.load %arg2[%c0_17, %c0_18, %c1_19, %c1_20, %c0_21] : memref<1x1x10x18x4xf32, #tpu.memory_space<vmem>>, vector<1x1x8x16x4xf32>
    %9 = vector.shape_cast %8 : vector<1x1x8x16x4xf32> to vector<8x16x4xf32>
    %c0_22 = arith.constant 0 : index
    %c0_23 = arith.constant 0 : index
    %c1_24 = arith.constant 1 : index
    %c2_25 = arith.constant 2 : index
    %c0_26 = arith.constant 0 : index
    %10 = vector.load %arg2[%c0_22, %c0_23, %c1_24, %c2_25, %c0_26] : memref<1x1x10x18x4xf32, #tpu.memory_space<vmem>>, vector<1x1x8x16x4xf32>
    %11 = vector.shape_cast %10 : vector<1x1x8x16x4xf32> to vector<8x16x4xf32>
    %c0_27 = arith.constant 0 : index
    %c0_28 = arith.constant 0 : index
    %c2_29 = arith.constant 2 : index
    %c0_30 = arith.constant 0 : index
    %c0_31 = arith.constant 0 : index
    %12 = vector.load %arg2[%c0_27, %c0_28, %c2_29, %c0_30, %c0_31] : memref<1x1x10x18x4xf32, #tpu.memory_space<vmem>>, vector<1x1x8x16x4xf32>
    %13 = vector.shape_cast %12 : vector<1x1x8x16x4xf32> to vector<8x16x4xf32>
    %c0_32 = arith.constant 0 : index
    %c0_33 = arith.constant 0 : index
    %c2_34 = arith.constant 2 : index
    %c1_35 = arith.constant 1 : index
    %c0_36 = arith.constant 0 : index
    %14 = vector.load %arg2[%c0_32, %c0_33, %c2_34, %c1_35, %c0_36] : memref<1x1x10x18x4xf32, #tpu.memory_space<vmem>>, vector<1x1x8x16x4xf32>
    %15 = vector.shape_cast %14 : vector<1x1x8x16x4xf32> to vector<8x16x4xf32>
    %c0_37 = arith.constant 0 : index
    %c0_38 = arith.constant 0 : index
    %c2_39 = arith.constant 2 : index
    %c2_40 = arith.constant 2 : index
    %c0_41 = arith.constant 0 : index
    %16 = vector.load %arg2[%c0_37, %c0_38, %c2_39, %c2_40, %c0_41] : memref<1x1x10x18x4xf32, #tpu.memory_space<vmem>>, vector<1x1x8x16x4xf32>
    %17 = vector.shape_cast %16 : vector<1x1x8x16x4xf32> to vector<8x16x4xf32>
    %18 = tpu.concatenate %1, %3, %5, %7, %9, %11, %13, %15, %17 in 2 : vector<8x16x4xf32>, vector<8x16x4xf32>, vector<8x16x4xf32>, vector<8x16x4xf32>, vector<8x16x4xf32>, vector<8x16x4xf32>, vector<8x16x4xf32>, vector<8x16x4xf32>, vector<8x16x4xf32> -> vector<8x16x36xf32>
    %19 = vector.shape_cast %18 : vector<8x16x36xf32> to vector<128x36xf32>
    %c0_42 = arith.constant 0 : index
    %c0_43 = arith.constant 0 : index
    %20 = vector.load %arg3[%c0_42, %c0_43] : memref<36x16xf32, #tpu.memory_space<vmem>>, vector<36x16xf32>
    %cst = arith.constant dense<0.000000e+00> : vector<128x16xf32>
    %21 = tpu.matmul %19, %20, %cst {dimension_numbers = #tpu.dot_dimension_numbers<[1], [0], [0], [1], [0, 0, 1, 1], [], []>} : vector<128x36xf32>, vector<36x16xf32>, vector<128x16xf32> -> vector<128x16xf32>
    %cst_44 = arith.constant dense<0.000000e+00> : vector<16xf32>
    %22 = vector.multi_reduction <add>, %21, %cst_44 [0] : vector<128x16xf32> to vector<16xf32>
    %23 = vector.shape_cast %22 : vector<16xf32> to vector<1x16xf32>
    %c0_45 = arith.constant 0 : index
    %c0_46 = arith.constant 0 : index
    %c0_47 = arith.constant 0 : index
    %c0_48 = arith.constant 0 : index
    %24 = vector.load %arg4[%c0_45, %c0_46, %c0_47, %c0_48] : memref<1x1x2x16xf32, #tpu.memory_space<vmem>>, vector<1x1x1x16xf32>
    %25 = vector.shape_cast %24 : vector<1x1x1x16xf32> to vector<1x16xf32>
    %26 = vector.shape_cast %23 : vector<1x16xf32> to vector<1x1x1x16xf32>
    tpu.vector_store %arg4[%c0_45, %c0_46, %c0_47, %c0_48], %26 {strides = array<i32>} : memref<1x1x2x16xf32, #tpu.memory_space<vmem>>, vector<1x1x1x16xf32>,
    %27 = arith.mulf %21, %21 : vector<128x16xf32>
    %cst_49 = arith.constant dense<0.000000e+00> : vector<16xf32>
    %28 = vector.multi_reduction <add>, %27, %cst_49 [0] : vector<128x16xf32> to vector<16xf32>
    %29 = vector.shape_cast %28 : vector<16xf32> to vector<1x16xf32>
    %c0_50 = arith.constant 0 : index
    %c0_51 = arith.constant 0 : index
    %c1_52 = arith.constant 1 : index
    %c0_53 = arith.constant 0 : index
    %30 = vector.load %arg4[%c0_50, %c0_51, %c1_52, %c0_53] : memref<1x1x2x16xf32, #tpu.memory_space<vmem>>, vector<1x1x1x16xf32>
    %31 = vector.shape_cast %30 : vector<1x1x1x16xf32> to vector<1x16xf32>
    %32 = vector.shape_cast %29 : vector<1x16xf32> to vector<1x1x1x16xf32>
    tpu.vector_store %arg4[%c0_50, %c0_51, %c1_52, %c0_53], %32 {strides = array<i32>} : memref<1x1x2x16xf32, #tpu.memory_space<vmem>>, vector<1x1x1x16xf32>,
    return
  }
  func.func @transform_0(%arg0: i32, %arg1: i32) -> (i32, i32, i32, i32, i32) {
    %c0_i32 = arith.constant 0 : i32
    %c0_i32_0 = arith.constant 0 : i32
    %c0_i32_1 = arith.constant 0 : i32
    %c0_i32_2 = arith.constant 0 : i32
    return %arg0, %arg1, %c0_i32, %c0_i32_0, %c0_i32_1 : i32, i32, i32, i32, i32
  }
  func.func @transform_1(%arg0: i32, %arg1: i32) -> (i32, i32) {
    %c0_i32 = arith.constant 0 : i32
    %c0_i32_0 = arith.constant 0 : i32
    %c0_i32_1 = arith.constant 0 : i32
    return %c0_i32, %c0_i32_0 : i32, i32
  }
  func.func @transform_2(%arg0: i32, %arg1: i32) -> (i32, i32, i32, i32) {
    %c0_i32 = arith.constant 0 : i32
    %c0_i32_0 = arith.constant 0 : i32
    %c0_i32_1 = arith.constant 0 : i32
    return %arg0, %arg1, %c0_i32, %c0_i32_0 : i32, i32, i32, i32
  }
}

module attributes {stable_mosaic.version = 11 : i64} {
  func.func @_apply_kernel(%arg0: i32, %arg1: i32, %arg2: memref<1x1x10x18x4xf32, #tpu.memory_space<vmem>>, %arg3: memref<36x16xf32, #tpu.memory_space<vmem>>, %arg4: memref<16x4xf32, #tpu.memory_space<vmem>>, %arg5: memref<1x4xf32, #tpu.memory_space<vmem>>, %arg6: memref<1x1x128x4xf32, #tpu.memory_space<vmem>>) attributes {dimension_semantics = [#tpu.dimension_semantics<parallel>, #tpu.dimension_semantics<parallel>], iteration_bounds = array<i64: 2, 2>, scalar_prefetch = 0 : i64, scratch_operands = 0 : i64, tpu.core_type = #tpu.core_type<tc>, window_params = [{transform_indices = @transform_0, window_bounds = array<i64: 1, 1, 10, 18, 4>}, {pipeline_mode = #tpu.pipeline_mode<synchronous>, transform_indices = @transform_1, window_bounds = array<i64: 36, 16>}, {pipeline_mode = #tpu.pipeline_mode<synchronous>, transform_indices = @transform_2, window_bounds = array<i64: 16, 4>}, {pipeline_mode = #tpu.pipeline_mode<synchronous>, transform_indices = @transform_3, window_bounds = array<i64: 1, 4>}, {transform_indices = @transform_4, window_bounds = array<i64: 1, 1, 128, 4>}]} {
    %c0 = arith.constant 0 : index
    %c0_0 = arith.constant 0 : index
    %c0_1 = arith.constant 0 : index
    %c0_2 = arith.constant 0 : index
    %c0_3 = arith.constant 0 : index
    %0 = vector.load %arg2[%c0, %c0_0, %c0_1, %c0_2, %c0_3] : memref<1x1x10x18x4xf32, #tpu.memory_space<vmem>>, vector<1x1x8x16x4xf32>
    %1 = vector.shape_cast %0 : vector<1x1x8x16x4xf32> to vector<8x16x4xf32>
    %c0_4 = arith.constant 0 : index
    %c0_5 = arith.constant 0 : index
    %c0_6 = arith.constant 0 : index
    %c1 = arith.constant 1 : index
    %c0_7 = arith.constant 0 : index
    %2 = vector.load %arg2[%c0_4, %c0_5, %c0_6, %c1, %c0_7] : memref<1x1x10x18x4xf32, #tpu.memory_space<vmem>>, vector<1x1x8x16x4xf32>
    %3 = vector.shape_cast %2 : vector<1x1x8x16x4xf32> to vector<8x16x4xf32>
    %c0_8 = arith.constant 0 : index
    %c0_9 = arith.constant 0 : index
    %c0_10 = arith.constant 0 : index
    %c2 = arith.constant 2 : index
    %c0_11 = arith.constant 0 : index
    %4 = vector.load %arg2[%c0_8, %c0_9, %c0_10, %c2, %c0_11] : memref<1x1x10x18x4xf32, #tpu.memory_space<vmem>>, vector<1x1x8x16x4xf32>
    %5 = vector.shape_cast %4 : vector<1x1x8x16x4xf32> to vector<8x16x4xf32>
    %c0_12 = arith.constant 0 : index
    %c0_13 = arith.constant 0 : index
    %c1_14 = arith.constant 1 : index
    %c0_15 = arith.constant 0 : index
    %c0_16 = arith.constant 0 : index
    %6 = vector.load %arg2[%c0_12, %c0_13, %c1_14, %c0_15, %c0_16] : memref<1x1x10x18x4xf32, #tpu.memory_space<vmem>>, vector<1x1x8x16x4xf32>
    %7 = vector.shape_cast %6 : vector<1x1x8x16x4xf32> to vector<8x16x4xf32>
    %c0_17 = arith.constant 0 : index
    %c0_18 = arith.constant 0 : index
    %c1_19 = arith.constant 1 : index
    %c1_20 = arith.constant 1 : index
    %c0_21 = arith.constant 0 : index
    %8 = vector.load %arg2[%c0_17, %c0_18, %c1_19, %c1_20, %c0_21] : memref<1x1x10x18x4xf32, #tpu.memory_space<vmem>>, vector<1x1x8x16x4xf32>
    %9 = vector.shape_cast %8 : vector<1x1x8x16x4xf32> to vector<8x16x4xf32>
    %c0_22 = arith.constant 0 : index
    %c0_23 = arith.constant 0 : index
    %c1_24 = arith.constant 1 : index
    %c2_25 = arith.constant 2 : index
    %c0_26 = arith.constant 0 : index
    %10 = vector.load %arg2[%c0_22, %c0_23, %c1_24, %c2_25, %c0_26] : memref<1x1x10x18x4xf32, #tpu.memory_space<vmem>>, vector<1x1x8x16x4xf32>
    %11 = vector.shape_cast %10 : vector<1x1x8x16x4xf32> to vector<8x16x4xf32>
    %c0_27 = arith.constant 0 : index
    %c0_28 = arith.constant 0 : index
    %c2_29 = arith.constant 2 : index
    %c0_30 = arith.constant 0 : index
    %c0_31 = arith.constant 0 : index
    %12 = vector.load %arg2[%c0_27, %c0_28, %c2_29, %c0_30, %c0_31] : memref<1x1x10x18x4xf32, #tpu.memory_space<vmem>>, vector<1x1x8x16x4xf32>
    %13 = vector.shape_cast %12 : vector<1x1x8x16x4xf32> to vector<8x16x4xf32>
    %c0_32 = arith.constant 0 : index
    %c0_33 = arith.constant 0 : index
    %c2_34 = arith.constant 2 : index
    %c1_35 = arith.constant 1 : index
    %c0_36 = arith.constant 0 : index
    %14 = vector.load %arg2[%c0_32, %c0_33, %c2_34, %c1_35, %c0_36] : memref<1x1x10x18x4xf32, #tpu.memory_space<vmem>>, vector<1x1x8x16x4xf32>
    %15 = vector.shape_cast %14 : vector<1x1x8x16x4xf32> to vector<8x16x4xf32>
    %c0_37 = arith.constant 0 : index
    %c0_38 = arith.constant 0 : index
    %c2_39 = arith.constant 2 : index
    %c2_40 = arith.constant 2 : index
    %c0_41 = arith.constant 0 : index
    %16 = vector.load %arg2[%c0_37, %c0_38, %c2_39, %c2_40, %c0_41] : memref<1x1x10x18x4xf32, #tpu.memory_space<vmem>>, vector<1x1x8x16x4xf32>
    %17 = vector.shape_cast %16 : vector<1x1x8x16x4xf32> to vector<8x16x4xf32>
    %18 = tpu.concatenate %1, %3, %5, %7, %9, %11, %13, %15, %17 in 2 : vector<8x16x4xf32>, vector<8x16x4xf32>, vector<8x16x4xf32>, vector<8x16x4xf32>, vector<8x16x4xf32>, vector<8x16x4xf32>, vector<8x16x4xf32>, vector<8x16x4xf32>, vector<8x16x4xf32> -> vector<8x16x36xf32>
    %19 = vector.shape_cast %18 : vector<8x16x36xf32> to vector<128x36xf32>
    %c0_42 = arith.constant 0 : index
    %c0_43 = arith.constant 0 : index
    %20 = vector.load %arg3[%c0_42, %c0_43] : memref<36x16xf32, #tpu.memory_space<vmem>>, vector<36x16xf32>
    %cst = arith.constant dense<0.000000e+00> : vector<128x16xf32>
    %21 = tpu.matmul %19, %20, %cst {dimension_numbers = #tpu.dot_dimension_numbers<[1], [0], [0], [1], [0, 0, 1, 1], [], []>} : vector<128x36xf32>, vector<36x16xf32>, vector<128x16xf32> -> vector<128x16xf32>
    %c0_44 = arith.constant 0 : index
    %c0_45 = arith.constant 0 : index
    %22 = vector.load %arg4[%c0_44, %c0_45] : memref<16x4xf32, #tpu.memory_space<vmem>>, vector<16x4xf32>
    %cst_46 = arith.constant dense<0.000000e+00> : vector<128x4xf32>
    %23 = tpu.matmul %21, %22, %cst_46 {dimension_numbers = #tpu.dot_dimension_numbers<[1], [0], [0], [1], [0, 0, 1, 1], [], []>} : vector<128x16xf32>, vector<16x4xf32>, vector<128x4xf32> -> vector<128x4xf32>
    %c0_47 = arith.constant 0 : index
    %c0_48 = arith.constant 0 : index
    %c1_49 = arith.constant 1 : index
    %c1_50 = arith.constant 1 : index
    %c0_51 = arith.constant 0 : index
    %24 = vector.load %arg2[%c0_47, %c0_48, %c1_49, %c1_50, %c0_51] : memref<1x1x10x18x4xf32, #tpu.memory_space<vmem>>, vector<1x1x8x16x4xf32>
    %25 = vector.shape_cast %24 : vector<1x1x8x16x4xf32> to vector<8x16x4xf32>
    %26 = vector.shape_cast %25 : vector<8x16x4xf32> to vector<128x4xf32>
    %c0_52 = arith.constant 0 : index
    %c0_53 = arith.constant 0 : index
    %27 = vector.load %arg5[%c0_52, %c0_53] : memref<1x4xf32, #tpu.memory_space<vmem>>, vector<1x4xf32>
    %28 = vector.broadcast %27 : vector<1x4xf32> to vector<128x4xf32>
    %29 = arith.addf %23, %28 : vector<128x4xf32>
    %30 = arith.addf %29, %26 : vector<128x4xf32>
    %c0_54 = arith.constant 0 : index
    %c0_55 = arith.constant 0 : index
    %c0_56 = arith.constant 0 : index
    %c0_57 = arith.constant 0 : index
    %31 = vector.load %arg6[%c0_54, %c0_55, %c0_56, %c0_57] : memref<1x1x128x4xf32, #tpu.memory_space<vmem>>, vector<1x1x128x4xf32>
    %32 = vector.shape_cast %31 : vector<1x1x128x4xf32> to vector<128x4xf32>
    %33 = vector.shape_cast %30 : vector<128x4xf32> to vector<1x1x128x4xf32>
    tpu.vector_store %arg6[%c0_54, %c0_55, %c0_56, %c0_57], %33 {strides = array<i32>} : memref<1x1x128x4xf32, #tpu.memory_space<vmem>>, vector<1x1x128x4xf32>,
    return
  }
  func.func @transform_0(%arg0: i32, %arg1: i32) -> (i32, i32, i32, i32, i32) {
    %c0_i32 = arith.constant 0 : i32
    %c0_i32_0 = arith.constant 0 : i32
    %c0_i32_1 = arith.constant 0 : i32
    %c0_i32_2 = arith.constant 0 : i32
    return %arg0, %arg1, %c0_i32, %c0_i32_0, %c0_i32_1 : i32, i32, i32, i32, i32
  }
  func.func @transform_1(%arg0: i32, %arg1: i32) -> (i32, i32) {
    %c0_i32 = arith.constant 0 : i32
    %c0_i32_0 = arith.constant 0 : i32
    %c0_i32_1 = arith.constant 0 : i32
    return %c0_i32, %c0_i32_0 : i32, i32
  }
  func.func @transform_2(%arg0: i32, %arg1: i32) -> (i32, i32) {
    %c0_i32 = arith.constant 0 : i32
    %c0_i32_0 = arith.constant 0 : i32
    %c0_i32_1 = arith.constant 0 : i32
    return %c0_i32, %c0_i32_0 : i32, i32
  }
  func.func @transform_3(%arg0: i32, %arg1: i32) -> (i32, i32) {
    %c0_i32 = arith.constant 0 : i32
    %c0_i32_0 = arith.constant 0 : i32
    %c0_i32_1 = arith.constant 0 : i32
    return %c0_i32, %c0_i32_0 : i32, i32
  }
  func.func @transform_4(%arg0: i32, %arg1: i32) -> (i32, i32, i32, i32) {
    %c0_i32 = arith.constant 0 : i32
    %c0_i32_0 = arith.constant 0 : i32
    %c0_i32_1 = arith.constant 0 : i32
    return %arg0, %arg1, %c0_i32, %c0_i32_0 : i32, i32, i32, i32
  }
}

</mosaic_0001>

<llo_original>
// kernel: block_forward.2
$region0: #{block_forward.2}
  #allocation0 [shape = 'u32[]', space=smem, size = 0x4, offset = 0x4, fixed_abs, tag = 'smem constant byte address 0x4 - core index']
  #allocation1 [shape = 'u32[144,128]{1,0:T(1,128)}', space=vmem, size = 0x12000, scoped, tag = 'internal scratch']
  %s0 = inlined_call_operand.vmem [shape: f32[2,2,10,18,4], index: 0, kind: input, shape index: {}]
  %s1 = inlined_call_operand.vmem [shape: f32[36,16], index: 1, kind: input, shape index: {}]
  %s2 = inlined_call_operand.vmem [shape: f32[2,2,2,16], index: 2, kind: output, shape index: {}]
  %s3 = sld [smem:[#allocation0]]
  $region41: #{block_forward.2} parent=0
    _
  %s5 = ssub.s32 1, %s3
  %s6 = scalar_select 0, %s5, %s3
  loop: start=0, step=1, limit=6
  $region2: #{block_forward.2} parent=0 // loop_pre_header
    _
  $region3: #{block_forward.2} parent=0 // loop_header
    %s8 = sphi 0, %s12
    %p9 = scmp.ge.s32.totalorder %s8, 6
    %s15 = sphi 0, %s27
    %s16 = sphi 0, %s23
    %s17 = sphi 0, %s15
    %s18 = sphi 0, %s16
    %s19 = sphi 0, %s17
    %s20 = sphi 0, %s18
    %s32 = sphi 0, %s34
    %s35 = sphi 0, %s32
    %s36 = sphi 0, %s35
    %s52 = sphi 0, %s36
    %s56 = sphi 0, %s56
    %s58 = sphi 0, %s56
    %s59 = sphi 0, %s58
    %s73 = sphi 0, %s59
    %s81 = sphi 0, %s83
    %s84 = sphi 0, %s81
    %s85 = sphi 0, %s84
    %s101 = sphi 0, %s85
  $region4: #{block_forward.2} parent=0 // loop_header_branch
    %11 = sbr.rel (%p9) target = $region8
  $region5: #{block_forward.2} parent=0 // loop_body
    %s13 = ssub.s32 %s8, 1
    %s14 = ssub.s32 %s8, 2
    %s21 = sadd.s32 1, %s16
    %p22 = scmp.ge.s32.totalorder %s21, 2
    %s23 = scalar_select %p22, 0, %s21
    %s24 = sadd.s32 1, %s15
    %s25 = scalar_select %p22, %s24, %s15
    %p26 = scmp.ge.s32.totalorder %s25, 2
    %s27 = scalar_select %p26, 0, %s25
    %s28 = ssub.s32 %s15, %s27
    %s29 = ssub.s32 %s16, %s23
    %s30 = sor.u32 %s28, %s29
    %p31 = scmp.eq.s32.totalorder %s30, 0
    %s33 = sadd.s32 %s32, 1
    %s34 = scalar_select %p31, %s32, %s33
    %p37 = pneg %p31
    %p38 = scmp.eq.s32.totalorder %s8, 3
    %p39 = por %p37, %p38
    %p40 = scmp.ne.s32.totalorder %s32, %s35
    %p41 = scmp.eq.s32.totalorder %s8, 0
    %p42 = por %p40, %p41
    %p43 = scmp.ne.s32.totalorder %s32, %s35
    %p44 = scmp.eq.s32.totalorder %s13, 3
    %p45 = por %p43, %p44
    %p46 = scmp.ne.s32.totalorder %s35, %s36
    %p47 = scmp.eq.s32.totalorder %s13, 0
    %p48 = por %p46, %p47
    %p49 = scmp.ne.s32.totalorder %s35, %s36
    %p50 = scmp.eq.s32.totalorder %s14, 3
    %p51 = por %p49, %p50
    %p53 = scmp.ne.s32.totalorder %s36, %s52
    %p54 = scmp.eq.s32.totalorder %s14, 0
    %p55 = por %p53, %p54
    %s57 = sadd.s32 %s56, 1
    %p60 = scmp.eq.s32.totalorder %s8, 3
    %p61 = scmp.ne.s32.totalorder %s56, %s58
    %p62 = scmp.eq.s32.totalorder %s8, 0
    %p63 = por %p61, %p62
    %p64 = scmp.ne.s32.totalorder %s56, %s58
    %p65 = scmp.eq.s32.totalorder %s13, 3
    %p66 = por %p64, %p65
    %p67 = scmp.ne.s32.totalorder %s58, %s59
    %p68 = scmp.eq.s32.totalorder %s13, 0
    %p69 = por %p67, %p68
    %p70 = scmp.ne.s32.totalorder %s58, %s59
    %p71 = scmp.eq.s32.totalorder %s14, 3
    %p72 = por %p70, %p71
    %p74 = scmp.ne.s32.totalorder %s59, %s73
    %p75 = scmp.eq.s32.totalorder %s14, 0
    %p76 = por %p74, %p75
    %s77 = ssub.s32 %s15, %s27
    %s78 = ssub.s32 %s16, %s23
    %s79 = sor.u32 %s77, %s78
    %p80 = scmp.eq.s32.totalorder %s79, 0
    %s82 = sadd.s32 %s81, 1
    %s83 = scalar_select %p80, %s81, %s82
    %p86 = pneg %p80
    %p87 = scmp.eq.s32.totalorder %s8, 3
    %p88 = por %p86, %p87
    %p89 = scmp.ne.s32.totalorder %s81, %s84
    %p90 = scmp.eq.s32.totalorder %s8, 0
    %p91 = por %p89, %p90
    %p92 = scmp.ne.s32.totalorder %s81, %s84
    %p93 = scmp.eq.s32.totalorder %s13, 3
    %p94 = por %p92, %p93
    %p95 = scmp.ne.s32.totalorder %s84, %s85
    %p96 = scmp.eq.s32.totalorder %s13, 0
    %p97 = por %p95, %p96
    %p98 = scmp.ne.s32.totalorder %s84, %s85
    %p99 = scmp.eq.s32.totalorder %s14, 3
    %p100 = por %p98, %p99
    %p102 = scmp.ne.s32.totalorder %s85, %s101
    %p103 = scmp.eq.s32.totalorder %s14, 0
    %p104 = por %p102, %p103
    %p105 = scmp.le.s32.totalorder 1, %s8
    %p106 = scmp.lt.s32.totalorder %s8, 5
    %p107 = pnand %p105, %p106
    %p108 = pneg %p107
    // Predicated region
    $region9: #{block_forward.2} parent=5 // pred_check
      _
    $region10: #{block_forward.2} parent=5 // pred_check_branch
      %110 = sbr.rel (%p107) target = $region12
    $region11: #{block_forward.2} parent=5 // pred_region
      %s111 = ssub.s32 %s8, 1
      // Predicated region
      $region13: #{block_forward.2} parent=11 // pred_check
        %p112 = pneg %p69
      $region14: #{block_forward.2} parent=11 // pred_check_branch
        %114 = sbr.rel (%p112) target = $region16
      $region15: #{block_forward.2} parent=11 // pred_region
        _
      $region16: #{block_forward.2} parent=11 // pred_fallthru
        _
    $region12: #{block_forward.2} parent=5 // pred_fallthru
      _
    %p115 = scmp.lt.s32.totalorder %s8, 4
    // Predicated region
    $region17: #{block_forward.2} parent=5 // pred_check
      %p116 = pneg %p115
    $region18: #{block_forward.2} parent=5 // pred_check_branch
      %118 = sbr.rel (%p116) target = $region20
    $region19: #{block_forward.2} parent=5 // pred_region
      // Predicated region
      $region21: #{block_forward.2} parent=19 // pred_check
        %p119 = pneg %p42
      $region22: #{block_forward.2} parent=19 // pred_check_branch
        %121 = sbr.rel (%p119) target = $region24
      $region23: #{block_forward.2} parent=19 // pred_region
        %p122 = scmp.lt.s32.totalorder %s15, 1
        %s123 = scalar_select %p122, %s15, 1
        %p124 = scmp.lt.s32.totalorder %s16, 1
        %s125 = scalar_select %p124, %s16, 1
        %s126 = smul.addr %s125, 30
        %s127 = smul.addr %s123, 60
        %s128 = sadd.s32 %s126, %s127
        %s129 = smul.addr %s128, 8
        %s130 = scalar_lea.vmem %s0, %s129
      $region24: #{block_forward.2} parent=19 // pred_fallthru
        _
    $region20: #{block_forward.2} parent=5 // pred_fallthru
      _
    %p131 = scmp.le.s32.totalorder 1, %s8
    %p132 = scmp.lt.s32.totalorder %s8, 5
    %p133 = pnand %p131, %p132
    %p134 = pneg %p133
    // Predicated region
    $region25: #{block_forward.2} parent=5 // pred_check
      _
    $region26: #{block_forward.2} parent=5 // pred_check_branch
      %136 = sbr.rel (%p133) target = $region28
    $region27: #{block_forward.2} parent=5 // pred_region
      %s137 = ssub.s32 %s8, 1
      %p138 = scmp.lt.s32.totalorder %s17, 1
      %s139 = scalar_select %p138, %s17, 1
      %p140 = scmp.lt.s32.totalorder %s18, 1
      %s141 = scalar_select %p140, %s18, 1
      %s142 = smul.addr %s141, 30
      %s143 = smul.addr %s139, 60
      %s144 = sadd.s32 %s142, %s143
      %s145 = smul.addr %s144, 8
      %s146 = scalar_lea.vmem %s0, %s145
      %p147 = pneg %p48
      %p148 = pneg %p45
      %p149 = pneg %p69
      %p150 = pneg %p66
      %p151 = pneg %p97
      %p152 = pneg %p94
      %p153 = scmp.lt.s32.totalorder %s17, 1
      %s154 = scalar_select %p153, %s17, 1
      %p155 = scmp.lt.s32.totalorder %s18, 1
      %s156 = scalar_select %p155, %s18, 1
      %s157 = smul.addr %s154, 2
      %s158 = sadd.s32 %s156, %s157
      %s159 = smul.addr %s158, 2
      %s160 = scalar_lea.vmem %s2, %s159
      %p161 = scmp.lt.s32.totalorder %s17, 1
      %s162 = scalar_select %p161, %s17, 1
      %p163 = scmp.lt.s32.totalorder %s18, 1
      %s164 = scalar_select %p163, %s18, 1
      %s165 = smul.addr %s164, 30
      %s166 = smul.addr %s162, 60
      %s167 = sadd.s32 %s165, %s166
      %s168 = smul.addr %s167, 8
      %s169 = scalar_lea.vmem %s0, %s168
      %p170 = scmp.lt.s32.totalorder %s17, 1
      %s171 = scalar_select %p170, %s17, 1
      %p172 = scmp.lt.s32.totalorder %s18, 1
      %s173 = scalar_select %p172, %s18, 1
      %s174 = smul.addr %s171, 2
      %s175 = sadd.s32 %s173, %s174
      %s176 = smul.addr %s175, 2
      %s177 = scalar_lea.vmem %s2, %s176
      %v178 = vld [vmem:[%s169] sm:$0xff]
      %v179 = vld [vmem:[%s169 + $0x8] sm:$0xff]
      %v180 = vld [vmem:[%s169 + $0x18] sm:$0xff]
      %v181 = vld [vmem:[%s169 + $0x20] sm:$0xff]
      %v182 = vld [vmem:[%s169 + $0x30] sm:$0xff]
      %v183 = vld [vmem:[%s169 + $0x38] sm:$0xff]
      %v184 = vld [vmem:[%s169 + $0x48] sm:$0xff]
      %v185 = vld [vmem:[%s169 + $0x50] sm:$0xff]
      %v186 = vld [vmem:[%s169 + $0x60] sm:$0xff]
      %v187 = vld [vmem:[%s169 + $0x68] sm:$0xff]
      %v188 = vld [vmem:[%s169 + $0x78] sm:$0xff]
      %v189 = vld [vmem:[%s169 + $0x80] sm:$0xff]
      %v190 = vld [vmem:[%s169 + $0x90] sm:$0xff]
      %v191 = vld [vmem:[%s169 + $0x98] sm:$0xff]
      %v192 = vld [vmem:[%s169 + $0xa8] sm:$0xff]
      %v193 = vld [vmem:[%s169 + $0xb0] sm:$0xff]
      %v194 = vld [vmem:[%s169 + $0x1] sm:$0xff]
      %v195 = vld [vmem:[%s169 + $0x9] sm:$0xff]
      %v196 = vld [vmem:[%s169 + $0x19] sm:$0xff]
      %v197 = vld [vmem:[%s169 + $0x21] sm:$0xff]
      %v198 = vld [vmem:[%s169 + $0x31] sm:$0xff]
      %v199 = vld [vmem:[%s169 + $0x39] sm:$0xff]
      %v200 = vld [vmem:[%s169 + $0x49] sm:$0xff]
      %v201 = vld [vmem:[%s169 + $0x51] sm:$0xff]
      %v202 = vld [vmem:[%s169 + $0x61] sm:$0xff]
      %v203 = vld [vmem:[%s169 + $0x69] sm:$0xff]
      %v204 = vld [vmem:[%s169 + $0x79] sm:$0xff]
      %v205 = vld [vmem:[%s169 + $0x81] sm:$0xff]
      %v206 = vld [vmem:[%s169 + $0x91] sm:$0xff]
      %v207 = vld [vmem:[%s169 + $0x99] sm:$0xff]
      %v208 = vld [vmem:[%s169 + $0xa9] sm:$0xff]
      %v209 = vld [vmem:[%s169 + $0xb1] sm:$0xff]
      %v210 = vld [vmem:[%s169 + $0x2] sm:$0xff]
      %v211 = vld [vmem:[%s169 + $0xa] sm:$0xff]
      %v212 = vld [vmem:[%s169 + $0x1a] sm:$0xff]
      %v213 = vld [vmem:[%s169 + $0x22] sm:$0xff]
      %v214 = vld [vmem:[%s169 + $0x32] sm:$0xff]
      %v215 = vld [vmem:[%s169 + $0x3a] sm:$0xff]
      %v216 = vld [vmem:[%s169 + $0x4a] sm:$0xff]
      %v217 = vld [vmem:[%s169 + $0x52] sm:$0xff]
      %v218 = vld [vmem:[%s169 + $0x62] sm:$0xff]
      %v219 = vld [vmem:[%s169 + $0x6a] sm:$0xff]
      %v220 = vld [vmem:[%s169 + $0x7a] sm:$0xff]
      %v221 = vld [vmem:[%s169 + $0x82] sm:$0xff]
      %v222 = vld [vmem:[%s169 + $0x92] sm:$0xff]
      %v223 = vld [vmem:[%s169 + $0x9a] sm:$0xff]
      %v224 = vld [vmem:[%s169 + $0xaa] sm:$0xff]
      %v225 = vld [vmem:[%s169 + $0xb2] sm:$0xff]
      %s226 = scalar_lea.vmem %s169, 24
      %v227 = vld [vmem:[%s226] sm:$0xff]
      %v228 = vld [vmem:[%s226 + $0x8] sm:$0xff]
      %v229 = vld [vmem:[%s226 + $0x18] sm:$0xff]
      %v230 = vld [vmem:[%s226 + $0x20] sm:$0xff]
      %v231 = vld [vmem:[%s226 + $0x30] sm:$0xff]
      %v232 = vld [vmem:[%s226 + $0x38] sm:$0xff]
      %v233 = vld [vmem:[%s226 + $0x48] sm:$0xff]
      %v234 = vld [vmem:[%s226 + $0x50] sm:$0xff]
      %v235 = vld [vmem:[%s226 + $0x60] sm:$0xff]
      %v236 = vld [vmem:[%s226 + $0x68] sm:$0xff]
      %v237 = vld [vmem:[%s226 + $0x78] sm:$0xff]
      %v238 = vld [vmem:[%s226 + $0x80] sm:$0xff]
      %v239 = vld [vmem:[%s226 + $0x90] sm:$0xff]
      %v240 = vld [vmem:[%s226 + $0x98] sm:$0xff]
      %v241 = vld [vmem:[%s226 + $0xa8] sm:$0xff]
      %v242 = vld [vmem:[%s226 + $0xb0] sm:$0xff]
      %v243 = vld [vmem:[%s226 + $0x1] sm:$0xff]
      %v244 = vld [vmem:[%s226 + $0x9] sm:$0xff]
      %v245 = vld [vmem:[%s226 + $0x19] sm:$0xff]
      %v246 = vld [vmem:[%s226 + $0x21] sm:$0xff]
      %v247 = vld [vmem:[%s226 + $0x31] sm:$0xff]
      %v248 = vld [vmem:[%s226 + $0x39] sm:$0xff]
      %v249 = vld [vmem:[%s226 + $0x49] sm:$0xff]
      %v250 = vld [vmem:[%s226 + $0x51] sm:$0xff]
      %v251 = vld [vmem:[%s226 + $0x61] sm:$0xff]
      %v252 = vld [vmem:[%s226 + $0x69] sm:$0xff]
      %v253 = vld [vmem:[%s226 + $0x79] sm:$0xff]
      %v254 = vld [vmem:[%s226 + $0x81] sm:$0xff]
      %v255 = vld [vmem:[%s226 + $0x91] sm:$0xff]
      %v256 = vld [vmem:[%s226 + $0x99] sm:$0xff]
      %v257 = vld [vmem:[%s226 + $0xa9] sm:$0xff]
      %v258 = vld [vmem:[%s226 + $0xb1] sm:$0xff]
      %v259 = vld [vmem:[%s226 + $0x2] sm:$0xff]
      %v260 = vld [vmem:[%s226 + $0xa] sm:$0xff]
      %v261 = vld [vmem:[%s226 + $0x1a] sm:$0xff]
      %v262 = vld [vmem:[%s226 + $0x22] sm:$0xff]
      %v263 = vld [vmem:[%s226 + $0x32] sm:$0xff]
      %v264 = vld [vmem:[%s226 + $0x3a] sm:$0xff]
      %v265 = vld [vmem:[%s226 + $0x4a] sm:$0xff]
      %v266 = vld [vmem:[%s226 + $0x52] sm:$0xff]
      %v267 = vld [vmem:[%s226 + $0x62] sm:$0xff]
      %v268 = vld [vmem:[%s226 + $0x6a] sm:$0xff]
      %v269 = vld [vmem:[%s226 + $0x7a] sm:$0xff]
      %v270 = vld [vmem:[%s226 + $0x82] sm:$0xff]
      %v271 = vld [vmem:[%s226 + $0x92] sm:$0xff]
      %v272 = vld [vmem:[%s226 + $0x9a] sm:$0xff]
      %v273 = vld [vmem:[%s226 + $0xaa] sm:$0xff]
      %v274 = vld [vmem:[%s226 + $0xb2] sm:$0xff]
      %s275 = scalar_lea.vmem %s169, 48
      %v276 = vld [vmem:[%s275] sm:$0xff]
      %v277 = vld [vmem:[%s275 + $0x8] sm:$0xff]
      %v278 = vld [vmem:[%s275 + $0x18] sm:$0xff]
      %v279 = vld [vmem:[%s275 + $0x20] sm:$0xff]
      %v280 = vld [vmem:[%s275 + $0x30] sm:$0xff]
      %v281 = vld [vmem:[%s275 + $0x38] sm:$0xff]
      %v282 = vld [vmem:[%s275 + $0x48] sm:$0xff]
      %v283 = vld [vmem:[%s275 + $0x50] sm:$0xff]
      %v284 = vld [vmem:[%s275 + $0x60] sm:$0xff]
      %v285 = vld [vmem:[%s275 + $0x68] sm:$0xff]
      %v286 = vld [vmem:[%s275 + $0x78] sm:$0xff]
      %v287 = vld [vmem:[%s275 + $0x80] sm:$0xff]
      %v288 = vld [vmem:[%s275 + $0x90] sm:$0xff]
      %v289 = vld [vmem:[%s275 + $0x98] sm:$0xff]
      %v290 = vld [vmem:[%s275 + $0xa8] sm:$0xff]
      %v291 = vld [vmem:[%s275 + $0xb0] sm:$0xff]
      %v292 = vld [vmem:[%s275 + $0x1] sm:$0xff]
      %v293 = vld [vmem:[%s275 + $0x9] sm:$0xff]
      %v294 = vld [vmem:[%s275 + $0x19] sm:$0xff]
      %v295 = vld [vmem:[%s275 + $0x21] sm:$0xff]
      %v296 = vld [vmem:[%s275 + $0x31] sm:$0xff]
      %v297 = vld [vmem:[%s275 + $0x39] sm:$0xff]
      %v298 = vld [vmem:[%s275 + $0x49] sm:$0xff]
      %v299 = vld [vmem:[%s275 + $0x51] sm:$0xff]
      %v300 = vld [vmem:[%s275 + $0x61] sm:$0xff]
      %v301 = vld [vmem:[%s275 + $0x69] sm:$0xff]
      %v302 = vld [vmem:[%s275 + $0x79] sm:$0xff]
      %v303 = vld [vmem:[%s275 + $0x81] sm:$0xff]
      %v304 = vld [vmem:[%s275 + $0x91] sm:$0xff]
      %v305 = vld [vmem:[%s275 + $0x99] sm:$0xff]
      %v306 = vld [vmem:[%s275 + $0xa9] sm:$0xff]
      %v307 = vld [vmem:[%s275 + $0xb1] sm:$0xff]
      %v308 = vld [vmem:[%s275 + $0x2] sm:$0xff]
      %v309 = vld [vmem:[%s275 + $0xa] sm:$0xff]
      %v310 = vld [vmem:[%s275 + $0x1a] sm:$0xff]
      %v311 = vld [vmem:[%s275 + $0x22] sm:$0xff]
      %v312 = vld [vmem:[%s275 + $0x32] sm:$0xff]
      %v313 = vld [vmem:[%s275 + $0x3a] sm:$0xff]
      %v314 = vld [vmem:[%s275 + $0x4a] sm:$0xff]
      %v315 = vld [vmem:[%s275 + $0x52] sm:$0xff]
      %v316 = vld [vmem:[%s275 + $0x62] sm:$0xff]
      %v317 = vld [vmem:[%s275 + $0x6a] sm:$0xff]
      %v318 = vld [vmem:[%s275 + $0x7a] sm:$0xff]
      %v319 = vld [vmem:[%s275 + $0x82] sm:$0xff]
      %v320 = vld [vmem:[%s275 + $0x92] sm:$0xff]
      %v321 = vld [vmem:[%s275 + $0x9a] sm:$0xff]
      %v322 = vld [vmem:[%s275 + $0xaa] sm:$0xff]
      %v323 = vld [vmem:[%s275 + $0xb2] sm:$0xff]
      %340 = vrot.lane.b32.xlu0 %v194, 4
      %v341 = vpop.permute.xlu0 %340
      %342 = vrot.lane.b32.xlu0 %v195, 4
      %v343 = vpop.permute.xlu0 %342
      %344 = vrot.lane.b32.xlu0 %v196, 4
      %v345 = vpop.permute.xlu0 %344
      %346 = vrot.lane.b32.xlu0 %v197, 4
      %v347 = vpop.permute.xlu0 %346
      %348 = vrot.lane.b32.xlu0 %v198, 4
      %v349 = vpop.permute.xlu0 %348
      %350 = vrot.lane.b32.xlu0 %v199, 4
      %v351 = vpop.permute.xlu0 %350
      %352 = vrot.lane.b32.xlu0 %v200, 4
      %v353 = vpop.permute.xlu0 %352
      %354 = vrot.lane.b32.xlu0 %v201, 4
      %v355 = vpop.permute.xlu0 %354
      %356 = vrot.lane.b32.xlu0 %v202, 4
      %v357 = vpop.permute.xlu0 %356
      %358 = vrot.lane.b32.xlu0 %v203, 4
      %v359 = vpop.permute.xlu0 %358
      %360 = vrot.lane.b32.xlu0 %v204, 4
      %v361 = vpop.permute.xlu0 %360
      %362 = vrot.lane.b32.xlu0 %v205, 4
      %v363 = vpop.permute.xlu0 %362
      %364 = vrot.lane.b32.xlu0 %v206, 4
      %v365 = vpop.permute.xlu0 %364
      %366 = vrot.lane.b32.xlu0 %v207, 4
      %v367 = vpop.permute.xlu0 %366
      %368 = vrot.lane.b32.xlu0 %v208, 4
      %v369 = vpop.permute.xlu0 %368
      %370 = vrot.lane.b32.xlu0 %v209, 4
      %v371 = vpop.permute.xlu0 %370
      %404 = vrot.lane.b32.xlu0 %v210, 8
      %v405 = vpop.permute.xlu0 %404
      %406 = vrot.lane.b32.xlu0 %v211, 8
      %v407 = vpop.permute.xlu0 %406
      %408 = vrot.lane.b32.xlu0 %v212, 8
      %v409 = vpop.permute.xlu0 %408
      %410 = vrot.lane.b32.xlu0 %v213, 8
      %v411 = vpop.permute.xlu0 %410
      %412 = vrot.lane.b32.xlu0 %v214, 8
      %v413 = vpop.permute.xlu0 %412
      %414 = vrot.lane.b32.xlu0 %v215, 8
      %v415 = vpop.permute.xlu0 %414
      %416 = vrot.lane.b32.xlu0 %v216, 8
      %v417 = vpop.permute.xlu0 %416
      %418 = vrot.lane.b32.xlu0 %v217, 8
      %v419 = vpop.permute.xlu0 %418
      %420 = vrot.lane.b32.xlu0 %v218, 8
      %v421 = vpop.permute.xlu0 %420
      %422 = vrot.lane.b32.xlu0 %v219, 8
      %v423 = vpop.permute.xlu0 %422
      %424 = vrot.lane.b32.xlu0 %v220, 8
      %v425 = vpop.permute.xlu0 %424
      %426 = vrot.lane.b32.xlu0 %v221, 8
      %v427 = vpop.permute.xlu0 %426
      %428 = vrot.lane.b32.xlu0 %v222, 8
      %v429 = vpop.permute.xlu0 %428
      %430 = vrot.lane.b32.xlu0 %v223, 8
      %v431 = vpop.permute.xlu0 %430
      %432 = vrot.lane.b32.xlu0 %v224, 8
      %v433 = vpop.permute.xlu0 %432
      %434 = vrot.lane.b32.xlu0 %v225, 8
      %v435 = vpop.permute.xlu0 %434
      %468 = vrot.lane.b32.xlu0 %v227, 12
      %v469 = vpop.permute.xlu0 %468
      %470 = vrot.lane.b32.xlu0 %v228, 12
      %v471 = vpop.permute.xlu0 %470
      %472 = vrot.lane.b32.xlu0 %v229, 12
      %v473 = vpop.permute.xlu0 %472
      %474 = vrot.lane.b32.xlu0 %v230, 12
      %v475 = vpop.permute.xlu0 %474
      %476 = vrot.lane.b32.xlu0 %v231, 12
      %v477 = vpop.permute.xlu0 %476
      %478 = vrot.lane.b32.xlu0 %v232, 12
      %v479 = vpop.permute.xlu0 %478
      %480 = vrot.lane.b32.xlu0 %v233, 12
      %v481 = vpop.permute.xlu0 %480
      %482 = vrot.lane.b32.xlu0 %v234, 12
      %v483 = vpop.permute.xlu0 %482
      %484 = vrot.lane.b32.xlu0 %v235, 12
      %v485 = vpop.permute.xlu0 %484
      %486 = vrot.lane.b32.xlu0 %v236, 12
      %v487 = vpop.permute.xlu0 %486
      %488 = vrot.lane.b32.xlu0 %v237, 12
      %v489 = vpop.permute.xlu0 %488
      %490 = vrot.lane.b32.xlu0 %v238, 12
      %v491 = vpop.permute.xlu0 %490
      %492 = vrot.lane.b32.xlu0 %v239, 12
      %v493 = vpop.permute.xlu0 %492
      %494 = vrot.lane.b32.xlu0 %v240, 12
      %v495 = vpop.permute.xlu0 %494
      %496 = vrot.lane.b32.xlu0 %v241, 12
      %v497 = vpop.permute.xlu0 %496
      %498 = vrot.lane.b32.xlu0 %v242, 12
      %v499 = vpop.permute.xlu0 %498
      %532 = vrot.lane.b32.xlu0 %v243, 16
      %v533 = vpop.permute.xlu0 %532
      %534 = vrot.lane.b32.xlu0 %v244, 16
      %v535 = vpop.permute.xlu0 %534
      %536 = vrot.lane.b32.xlu0 %v245, 16
      %v537 = vpop.permute.xlu0 %536
      %538 = vrot.lane.b32.xlu0 %v246, 16
      %v539 = vpop.permute.xlu0 %538
      %540 = vrot.lane.b32.xlu0 %v247, 16
      %v541 = vpop.permute.xlu0 %540
      %542 = vrot.lane.b32.xlu0 %v248, 16
      %v543 = vpop.permute.xlu0 %542
      %544 = vrot.lane.b32.xlu0 %v249, 16
      %v545 = vpop.permute.xlu0 %544
      %546 = vrot.lane.b32.xlu0 %v250, 16
      %v547 = vpop.permute.xlu0 %546
      %548 = vrot.lane.b32.xlu0 %v251, 16
      %v549 = vpop.permute.xlu0 %548
      %550 = vrot.lane.b32.xlu0 %v252, 16
      %v551 = vpop.permute.xlu0 %550
      %552 = vrot.lane.b32.xlu0 %v253, 16
      %v553 = vpop.permute.xlu0 %552
      %554 = vrot.lane.b32.xlu0 %v254, 16
      %v555 = vpop.permute.xlu0 %554
      %556 = vrot.lane.b32.xlu0 %v255, 16
      %v557 = vpop.permute.xlu0 %556
      %558 = vrot.lane.b32.xlu0 %v256, 16
      %v559 = vpop.permute.xlu0 %558
      %560 = vrot.lane.b32.xlu0 %v257, 16
      %v561 = vpop.permute.xlu0 %560
      %562 = vrot.lane.b32.xlu0 %v258, 16
      %v563 = vpop.permute.xlu0 %562
      %596 = vrot.lane.b32.xlu0 %v259, 20
      %v597 = vpop.permute.xlu0 %596
      %598 = vrot.lane.b32.xlu0 %v260, 20
      %v599 = vpop.permute.xlu0 %598
      %600 = vrot.lane.b32.xlu0 %v261, 20
      %v601 = vpop.permute.xlu0 %600
      %602 = vrot.lane.b32.xlu0 %v262, 20
      %v603 = vpop.permute.xlu0 %602
      %604 = vrot.lane.b32.xlu0 %v263, 20
      %v605 = vpop.permute.xlu0 %604
      %606 = vrot.lane.b32.xlu0 %v264, 20
      %v607 = vpop.permute.xlu0 %606
      %608 = vrot.lane.b32.xlu0 %v265, 20
      %v609 = vpop.permute.xlu0 %608
      %610 = vrot.lane.b32.xlu0 %v266, 20
      %v611 = vpop.permute.xlu0 %610
      %612 = vrot.lane.b32.xlu0 %v267, 20
      %v613 = vpop.permute.xlu0 %612
      %614 = vrot.lane.b32.xlu0 %v268, 20
      %v615 = vpop.permute.xlu0 %614
      %616 = vrot.lane.b32.xlu0 %v269, 20
      %v617 = vpop.permute.xlu0 %616
      %618 = vrot.lane.b32.xlu0 %v270, 20
      %v619 = vpop.permute.xlu0 %618
      %620 = vrot.lane.b32.xlu0 %v271, 20
      %v621 = vpop.permute.xlu0 %620
      %622 = vrot.lane.b32.xlu0 %v272, 20
      %v623 = vpop.permute.xlu0 %622
      %624 = vrot.lane.b32.xlu0 %v273, 20
      %v625 = vpop.permute.xlu0 %624
      %626 = vrot.lane.b32.xlu0 %v274, 20
      %v627 = vpop.permute.xlu0 %626
      %660 = vrot.lane.b32.xlu0 %v276, 24
      %v661 = vpop.permute.xlu0 %660
      %662 = vrot.lane.b32.xlu0 %v277, 24
      %v663 = vpop.permute.xlu0 %662
      %664 = vrot.lane.b32.xlu0 %v278, 24
      %v665 = vpop.permute.xlu0 %664
      %666 = vrot.lane.b32.xlu0 %v279, 24
      %v667 = vpop.permute.xlu0 %666
      %668 = vrot.lane.b32.xlu0 %v280, 24
      %v669 = vpop.permute.xlu0 %668
      %670 = vrot.lane.b32.xlu0 %v281, 24
      %v671 = vpop.permute.xlu0 %670
      %672 = vrot.lane.b32.xlu0 %v282, 24
      %v673 = vpop.permute.xlu0 %672
      %674 = vrot.lane.b32.xlu0 %v283, 24
      %v675 = vpop.permute.xlu0 %674
      %676 = vrot.lane.b32.xlu0 %v284, 24
      %v677 = vpop.permute.xlu0 %676
      %678 = vrot.lane.b32.xlu0 %v285, 24
      %v679 = vpop.permute.xlu0 %678
      %680 = vrot.lane.b32.xlu0 %v286, 24
      %v681 = vpop.permute.xlu0 %680
      %682 = vrot.lane.b32.xlu0 %v287, 24
      %v683 = vpop.permute.xlu0 %682
      %684 = vrot.lane.b32.xlu0 %v288, 24
      %v685 = vpop.permute.xlu0 %684
      %686 = vrot.lane.b32.xlu0 %v289, 24
      %v687 = vpop.permute.xlu0 %686
      %688 = vrot.lane.b32.xlu0 %v290, 24
      %v689 = vpop.permute.xlu0 %688
      %690 = vrot.lane.b32.xlu0 %v291, 24
      %v691 = vpop.permute.xlu0 %690
      %724 = vrot.lane.b32.xlu0 %v292, 28
      %v725 = vpop.permute.xlu0 %724
      %726 = vrot.lane.b32.xlu0 %v293, 28
      %v727 = vpop.permute.xlu0 %726
      %728 = vrot.lane.b32.xlu0 %v294, 28
      %v729 = vpop.permute.xlu0 %728
      %730 = vrot.lane.b32.xlu0 %v295, 28
      %v731 = vpop.permute.xlu0 %730
      %732 = vrot.lane.b32.xlu0 %v296, 28
      %v733 = vpop.permute.xlu0 %732
      %734 = vrot.lane.b32.xlu0 %v297, 28
      %v735 = vpop.permute.xlu0 %734
      %736 = vrot.lane.b32.xlu0 %v298, 28
      %v737 = vpop.permute.xlu0 %736
      %738 = vrot.lane.b32.xlu0 %v299, 28
      %v739 = vpop.permute.xlu0 %738
      %740 = vrot.lane.b32.xlu0 %v300, 28
      %v741 = vpop.permute.xlu0 %740
      %742 = vrot.lane.b32.xlu0 %v301, 28
      %v743 = vpop.permute.xlu0 %742
      %744 = vrot.lane.b32.xlu0 %v302, 28
      %v745 = vpop.permute.xlu0 %744
      %746 = vrot.lane.b32.xlu0 %v303, 28
      %v747 = vpop.permute.xlu0 %746
      %748 = vrot.lane.b32.xlu0 %v304, 28
      %v749 = vpop.permute.xlu0 %748
      %750 = vrot.lane.b32.xlu0 %v305, 28
      %v751 = vpop.permute.xlu0 %750
      %752 = vrot.lane.b32.xlu0 %v306, 28
      %v753 = vpop.permute.xlu0 %752
      %754 = vrot.lane.b32.xlu0 %v307, 28
      %v755 = vpop.permute.xlu0 %754
      %788 = vrot.lane.b32.xlu0 %v308, 32
      %v789 = vpop.permute.xlu0 %788
      %790 = vrot.lane.b32.xlu0 %v309, 32
      %v791 = vpop.permute.xlu0 %790
      %792 = vrot.lane.b32.xlu0 %v310, 32
      %v793 = vpop.permute.xlu0 %792
      %794 = vrot.lane.b32.xlu0 %v311, 32
      %v795 = vpop.permute.xlu0 %794
      %796 = vrot.lane.b32.xlu0 %v312, 32
      %v797 = vpop.permute.xlu0 %796
      %798 = vrot.lane.b32.xlu0 %v313, 32
      %v799 = vpop.permute.xlu0 %798
      %800 = vrot.lane.b32.xlu0 %v314, 32
      %v801 = vpop.permute.xlu0 %800
      %802 = vrot.lane.b32.xlu0 %v315, 32
      %v803 = vpop.permute.xlu0 %802
      %804 = vrot.lane.b32.xlu0 %v316, 32
      %v805 = vpop.permute.xlu0 %804
      %806 = vrot.lane.b32.xlu0 %v317, 32
      %v807 = vpop.permute.xlu0 %806
      %808 = vrot.lane.b32.xlu0 %v318, 32
      %v809 = vpop.permute.xlu0 %808
      %810 = vrot.lane.b32.xlu0 %v319, 32
      %v811 = vpop.permute.xlu0 %810
      %812 = vrot.lane.b32.xlu0 %v320, 32
      %v813 = vpop.permute.xlu0 %812
      %814 = vrot.lane.b32.xlu0 %v321, 32
      %v815 = vpop.permute.xlu0 %814
      %816 = vrot.lane.b32.xlu0 %v322, 32
      %v817 = vpop.permute.xlu0 %816
      %818 = vrot.lane.b32.xlu0 %v323, 32
      %v819 = vpop.permute.xlu0 %818
      %vm836 = vcmask 31744
      %v837 = vsel %vm836, %v178, %v341
      %v838 = vsel %vm836, %v179, %v343
      %v839 = vsel %vm836, %v180, %v345
      %v840 = vsel %vm836, %v181, %v347
      %v841 = vsel %vm836, %v182, %v349
      %v842 = vsel %vm836, %v183, %v351
      %v843 = vsel %vm836, %v184, %v353
      %v844 = vsel %vm836, %v185, %v355
      %v845 = vsel %vm836, %v186, %v357
      %v846 = vsel %vm836, %v187, %v359
      %v847 = vsel %vm836, %v188, %v361
      %v848 = vsel %vm836, %v189, %v363
      %v849 = vsel %vm836, %v190, %v365
      %v850 = vsel %vm836, %v191, %v367
      %v851 = vsel %vm836, %v192, %v369
      %v852 = vsel %vm836, %v193, %v371
      %vm853 = vcmask 64512
      %v854 = vsel %vm853, %v837, %v405
      %v855 = vsel %vm853, %v838, %v407
      %v856 = vsel %vm853, %v839, %v409
      %v857 = vsel %vm853, %v840, %v411
      %v858 = vsel %vm853, %v841, %v413
      %v859 = vsel %vm853, %v842, %v415
      %v860 = vsel %vm853, %v843, %v417
      %v861 = vsel %vm853, %v844, %v419
      %v862 = vsel %vm853, %v845, %v421
      %v863 = vsel %vm853, %v846, %v423
      %v864 = vsel %vm853, %v847, %v425
      %v865 = vsel %vm853, %v848, %v427
      %v866 = vsel %vm853, %v849, %v429
      %v867 = vsel %vm853, %v850, %v431
      %v868 = vsel %vm853, %v851, %v433
      %v869 = vsel %vm853, %v852, %v435
      %vm870 = vcmask 97280
      %v871 = vsel %vm870, %v854, %v469
      %v872 = vsel %vm870, %v855, %v471
      %v873 = vsel %vm870, %v856, %v473
      %v874 = vsel %vm870, %v857, %v475
      %v875 = vsel %vm870, %v858, %v477
      %v876 = vsel %vm870, %v859, %v479
      %v877 = vsel %vm870, %v860, %v481
      %v878 = vsel %vm870, %v861, %v483
      %v879 = vsel %vm870, %v862, %v485
      %v880 = vsel %vm870, %v863, %v487
      %v881 = vsel %vm870, %v864, %v489
      %v882 = vsel %vm870, %v865, %v491
      %v883 = vsel %vm870, %v866, %v493
      %v884 = vsel %vm870, %v867, %v495
      %v885 = vsel %vm870, %v868, %v497
      %v886 = vsel %vm870, %v869, %v499
      %vm887 = vcmask 130048
      %v888 = vsel %vm887, %v871, %v533
      %v889 = vsel %vm887, %v872, %v535
      %v890 = vsel %vm887, %v873, %v537
      %v891 = vsel %vm887, %v874, %v539
      %v892 = vsel %vm887, %v875, %v541
      %v893 = vsel %vm887, %v876, %v543
      %v894 = vsel %vm887, %v877, %v545
      %v895 = vsel %vm887, %v878, %v547
      %v896 = vsel %vm887, %v879, %v549
      %v897 = vsel %vm887, %v880, %v551
      %v898 = vsel %vm887, %v881, %v553
      %v899 = vsel %vm887, %v882, %v555
      %v900 = vsel %vm887, %v883, %v557
      %v901 = vsel %vm887, %v884, %v559
      %v902 = vsel %vm887, %v885, %v561
      %v903 = vsel %vm887, %v886, %v563
      %vm904 = vcmask 162816
      %v905 = vsel %vm904, %v888, %v597
      %v906 = vsel %vm904, %v889, %v599
      %v907 = vsel %vm904, %v890, %v601
      %v908 = vsel %vm904, %v891, %v603
      %v909 = vsel %vm904, %v892, %v605
      %v910 = vsel %vm904, %v893, %v607
      %v911 = vsel %vm904, %v894, %v609
      %v912 = vsel %vm904, %v895, %v611
      %v913 = vsel %vm904, %v896, %v613
      %v914 = vsel %vm904, %v897, %v615
      %v915 = vsel %vm904, %v898, %v617
      %v916 = vsel %vm904, %v899, %v619
      %v917 = vsel %vm904, %v900, %v621
      %v918 = vsel %vm904, %v901, %v623
      %v919 = vsel %vm904, %v902, %v625
      %v920 = vsel %vm904, %v903, %v627
      %vm921 = vcmask 195584
      %v922 = vsel %vm921, %v905, %v661
      %v923 = vsel %vm921, %v906, %v663
      %v924 = vsel %vm921, %v907, %v665
      %v925 = vsel %vm921, %v908, %v667
      %v926 = vsel %vm921, %v909, %v669
      %v927 = vsel %vm921, %v910, %v671
      %v928 = vsel %vm921, %v911, %v673
      %v929 = vsel %vm921, %v912, %v675
      %v930 = vsel %vm921, %v913, %v677
      %v931 = vsel %vm921, %v914, %v679
      %v932 = vsel %vm921, %v915, %v681
      %v933 = vsel %vm921, %v916, %v683
      %v934 = vsel %vm921, %v917, %v685
      %v935 = vsel %vm921, %v918, %v687
      %v936 = vsel %vm921, %v919, %v689
      %v937 = vsel %vm921, %v920, %v691
      %vm938 = vcmask 228352
      %v939 = vsel %vm938, %v922, %v725
      %v940 = vsel %vm938, %v923, %v727
      %v941 = vsel %vm938, %v924, %v729
      %v942 = vsel %vm938, %v925, %v731
      %v943 = vsel %vm938, %v926, %v733
      %v944 = vsel %vm938, %v927, %v735
      %v945 = vsel %vm938, %v928, %v737
      %v946 = vsel %vm938, %v929, %v739
      %v947 = vsel %vm938, %v930, %v741
      %v948 = vsel %vm938, %v931, %v743
      %v949 = vsel %vm938, %v932, %v745
      %v950 = vsel %vm938, %v933, %v747
      %v951 = vsel %vm938, %v934, %v749
      %v952 = vsel %vm938, %v935, %v751
      %v953 = vsel %vm938, %v936, %v753
      %v954 = vsel %vm938, %v937, %v755
      %vm955 = vcmask 261120
      %v956 = vsel %vm955, %v939, %v789
      %v957 = vsel %vm955, %v940, %v791
      %v958 = vsel %vm955, %v941, %v793
      %v959 = vsel %vm955, %v942, %v795
      %v960 = vsel %vm955, %v943, %v797
      %v961 = vsel %vm955, %v944, %v799
      %v962 = vsel %vm955, %v945, %v801
      %v963 = vsel %vm955, %v946, %v803
      %v964 = vsel %vm955, %v947, %v805
      %v965 = vsel %vm955, %v948, %v807
      %v966 = vsel %vm955, %v949, %v809
      %v967 = vsel %vm955, %v950, %v811
      %v968 = vsel %vm955, %v951, %v813
      %v969 = vsel %vm955, %v952, %v815
      %v970 = vsel %vm955, %v953, %v817
      %v971 = vsel %vm955, %v954, %v819
      %v972 = vld [vmem:[%s1] sm:$0xff]
      %v973 = vld [vmem:[%s1 + $0x8] sm:$0xff]
      %v974 = vld [vmem:[%s1 + $0x10] sm:$0xff]
      %v975 = vld [vmem:[%s1 + $0x18] sm:$0xff]
      %v976 = vld [vmem:[%s1 + $0x20] sm:$0xf]
      %vm977 = vcmask 293888
      %v979 = vsel %vm977, %v956, 0
      %v982 = vsel %vm977, %v957, 0
      %v985 = vsel %vm977, %v958, 0
      %v988 = vsel %vm977, %v959, 0
      %v991 = vsel %vm977, %v960, 0
      %v994 = vsel %vm977, %v961, 0
      %v997 = vsel %vm977, %v962, 0
      %v1000 = vsel %vm977, %v963, 0
      %v1003 = vsel %vm977, %v964, 0
      %v1006 = vsel %vm977, %v965, 0
      %v1009 = vsel %vm977, %v966, 0
      %v1012 = vsel %vm977, %v967, 0
      %v1015 = vsel %vm977, %v968, 0
      %v1018 = vsel %vm977, %v969, 0
      %v1021 = vsel %vm977, %v970, 0
      %v1024 = vsel %vm977, %v971, 0
      %vm1026 = vcmask 1043456
      %v1028 = vsel %vm1026, %v976, 0
      %1030 = vmatprep.subr.mxu0 0.0
      %1031 = vmatpush1.msra.mxu0 0.0
      %1032 = vmatprep.subr.mxu0 0.0
      %1033 = vmatpush1.msra.mxu0 0.0
      %1034 = vmatprep.subr.mxu0 0.0
      %1035 = vmatpush1.msra.mxu0 0.0
      %1036 = vmatprep.subr.mxu0 0.0
      %1037 = vmatpush1.msra.mxu0 0.0
      %1038 = vmatprep.subr.mxu0 0.0
      %1039 = vmatpush1.msra.mxu0 0.0
      %1040 = vmatprep.subr.mxu0 0.0
      %1041 = vmatpush1.msra.mxu0 0.0
      %1042 = vmatprep.subr.mxu0 0.0
      %1043 = vmatpush1.msra.mxu0 0.0
      %1044 = vmatprep.subr.mxu0 0.0
      %1045 = vmatpush1.msra.mxu0 0.0
      %1046 = vmatprep.subr.mxu0 0.0
      %1047 = vmatpush1.msra.mxu0 0.0
      %1048 = vmatprep.subr.mxu0 0.0
      %1049 = vmatpush1.msra.mxu0 0.0
      %1050 = vmatprep.subr.mxu0 0.0
      %1051 = vmatpush1.msra.mxu0 0.0
      %1052 = vmatprep.subr.mxu0 0.0
      %1053 = vmatpush1.msra.mxu0 %v1028
      %1054 = vmatprep.subr.mxu0 0.0
      %1055 = vmatpush1.msra.mxu0 %v975
      %1056 = vmatprep.subr.mxu0 0.0
      %1057 = vmatpush1.msra.mxu0 %v974
      %1058 = vmatprep.subr.mxu0 0.0
      %1059 = vmatpush1.msra.mxu0 %v973
      %1060 = vmatprep.subr.mxu0 0.0
      %1061 = vmatpush1.msra.mxu0 %v972
      %1062 = vmatprep.subr.mxu0 0.0
      %1063 = vmatpush2.msra.mxu0 0.0
      %1064 = vmatprep.subr.mxu0 0.0
      %1065 = vmatpush2.msra.mxu0 0.0
      %1066 = vmatprep.subr.mxu0 0.0
      %1067 = vmatpush2.msra.mxu0 0.0
      %1068 = vmatprep.subr.mxu0 0.0
      %1069 = vmatpush2.msra.mxu0 0.0
      %1070 = vmatprep.subr.mxu0 0.0
      %1071 = vmatpush2.msra.mxu0 0.0
      %1072 = vmatprep.subr.mxu0 0.0
      %1073 = vmatpush2.msra.mxu0 0.0
      %1074 = vmatprep.subr.mxu0 0.0
      %1075 = vmatpush2.msra.mxu0 0.0
      %1076 = vmatprep.subr.mxu0 0.0
      %1077 = vmatpush2.msra.mxu0 0.0
      %1078 = vmatprep.subr.mxu0 0.0
      %1079 = vmatpush2.msra.mxu0 0.0
      %1080 = vmatprep.subr.mxu0 0.0
      %1081 = vmatpush2.msra.mxu0 0.0
      %1082 = vmatprep.subr.mxu0 0.0
      %1083 = vmatpush2.msra.mxu0 0.0
      %1084 = vmatprep.subr.mxu0 0.0
      %1085 = vmatpush2.msra.mxu0 0.0
      %1086 = vmatprep.subr.mxu0 0.0
      %1087 = vmatpush2.msra.mxu0 0.0
      %1088 = vmatprep.subr.mxu0 0.0
      %1089 = vmatpush2.msra.mxu0 0.0
      %1090 = vmatprep.subr.mxu0 0.0
      %1091 = vmatpush2.msra.mxu0 0.0
      %1092 = vmatprep.subr.mxu0 0.0
      %1093 = vmatpush2.msra.mxu0 0.0
      %1094 = vmatprep.mubr.f32.mxu0 0.0
      %1095 = vmatmul.mubr.f32.gmra.mxu0 %v979
      %v1096 = vpop.f32.mrf.mxu0
      %v1097 = vadd.f32 0.0, %v1096
      %v1098 = vpop.f32.mrf.mxu0
      %1099 = vmatprep.mubr.f32.mxu0 0.0
      %1100 = vmatmul.mubr.f32.gmra.mxu0 %v982
      %v1101 = vpop.f32.mrf.mxu0
      %v1102 = vadd.f32 0.0, %v1101
      %v1103 = vpop.f32.mrf.mxu0
      %1104 = vmatprep.mubr.f32.mxu0 0.0
      %1105 = vmatmul.mubr.f32.gmra.mxu0 %v985
      %v1106 = vpop.f32.mrf.mxu0
      %v1107 = vadd.f32 0.0, %v1106
      %v1108 = vpop.f32.mrf.mxu0
      %1109 = vmatprep.mubr.f32.mxu0 0.0
      %1110 = vmatmul.mubr.f32.gmra.mxu0 %v988
      %v1111 = vpop.f32.mrf.mxu0
      %v1112 = vadd.f32 0.0, %v1111
      %v1113 = vpop.f32.mrf.mxu0
      %1114 = vmatprep.mubr.f32.mxu0 0.0
      %1115 = vmatmul.mubr.f32.gmra.mxu0 %v991
      %v1116 = vpop.f32.mrf.mxu0
      %v1117 = vadd.f32 0.0, %v1116
      %v1118 = vpop.f32.mrf.mxu0
      %1119 = vmatprep.mubr.f32.mxu0 0.0
      %1120 = vmatmul.mubr.f32.gmra.mxu0 %v994
      %v1121 = vpop.f32.mrf.mxu0
      %v1122 = vadd.f32 0.0, %v1121
      %v1123 = vpop.f32.mrf.mxu0
      %1124 = vmatprep.mubr.f32.mxu0 0.0
      %1125 = vmatmul.mubr.f32.gmra.mxu0 %v997
      %v1126 = vpop.f32.mrf.mxu0
      %v1127 = vadd.f32 0.0, %v1126
      %v1128 = vpop.f32.mrf.mxu0
      %1129 = vmatprep.mubr.f32.mxu0 0.0
      %1130 = vmatmul.mubr.f32.gmra.mxu0 %v1000
      %v1131 = vpop.f32.mrf.mxu0
      %v1132 = vadd.f32 0.0, %v1131
      %v1133 = vpop.f32.mrf.mxu0
      %1134 = vmatprep.mubr.f32.mxu0 0.0
      %1135 = vmatmul.mubr.f32.gmra.mxu0 %v1003
      %v1136 = vpop.f32.mrf.mxu0
      %v1137 = vadd.f32 0.0, %v1136
      %v1138 = vpop.f32.mrf.mxu0
      %1139 = vmatprep.mubr.f32.mxu0 0.0
      %1140 = vmatmul.mubr.f32.gmra.mxu0 %v1006
      %v1141 = vpop.f32.mrf.mxu0
      %v1142 = vadd.f32 0.0, %v1141
      %v1143 = vpop.f32.mrf.mxu0
      %1144 = vmatprep.mubr.f32.mxu0 0.0
      %1145 = vmatmul.mubr.f32.gmra.mxu0 %v1009
      %v1146 = vpop.f32.mrf.mxu0
      %v1147 = vadd.f32 0.0, %v1146
      %v1148 = vpop.f32.mrf.mxu0
      %1149 = vmatprep.mubr.f32.mxu0 0.0
      %1150 = vmatmul.mubr.f32.gmra.mxu0 %v1012
      %v1151 = vpop.f32.mrf.mxu0
      %v1152 = vadd.f32 0.0, %v1151
      %v1153 = vpop.f32.mrf.mxu0
      %1154 = vmatprep.mubr.f32.mxu0 0.0
      %1155 = vmatmul.mubr.f32.gmra.mxu0 %v1015
      %v1156 = vpop.f32.mrf.mxu0
      %v1157 = vadd.f32 0.0, %v1156
      %v1158 = vpop.f32.mrf.mxu0
      %1159 = vmatprep.mubr.f32.mxu0 0.0
      %1160 = vmatmul.mubr.f32.gmra.mxu0 %v1018
      %v1161 = vpop.f32.mrf.mxu0
      %v1162 = vadd.f32 0.0, %v1161
      %v1163 = vpop.f32.mrf.mxu0
      %1164 = vmatprep.mubr.f32.mxu0 0.0
      %1165 = vmatmul.mubr.f32.gmra.mxu0 %v1021
      %v1166 = vpop.f32.mrf.mxu0
      %v1167 = vadd.f32 0.0, %v1166
      %v1168 = vpop.f32.mrf.mxu0
      %1169 = vmatprep.mubr.f32.mxu0 0.0
      %1170 = vmatmul.mubr.f32.gmra.mxu0 %v1024
      %v1171 = vpop.f32.mrf.mxu0
      %v1172 = vadd.f32 0.0, %v1171
      %v1173 = vpop.f32.mrf.mxu0
      %1174 = vdwg.mxu0
      %v1175 = vsel %vm887, %v1097, 0.0
      %v1176 = vsel %vm887, %v1102, 0.0
      %v1177 = vadd.f32 %v1175, %v1176
      %v1178 = vsel %vm887, %v1107, 0.0
      %v1179 = vadd.f32 %v1177, %v1178
      %v1180 = vsel %vm887, %v1112, 0.0
      %v1181 = vadd.f32 %v1179, %v1180
      %v1182 = vsel %vm887, %v1117, 0.0
      %v1183 = vadd.f32 %v1181, %v1182
      %v1184 = vsel %vm887, %v1122, 0.0
      %v1185 = vadd.f32 %v1183, %v1184
      %v1186 = vsel %vm887, %v1127, 0.0
      %v1187 = vadd.f32 %v1185, %v1186
      %v1188 = vsel %vm887, %v1132, 0.0
      %v1189 = vadd.f32 %v1187, %v1188
      %v1190 = vsel %vm887, %v1137, 0.0
      %v1191 = vadd.f32 %v1189, %v1190
      %v1192 = vsel %vm887, %v1142, 0.0
      %v1193 = vadd.f32 %v1191, %v1192
      %v1194 = vsel %vm887, %v1147, 0.0
      %v1195 = vadd.f32 %v1193, %v1194
      %v1196 = vsel %vm887, %v1152, 0.0
      %v1197 = vadd.f32 %v1195, %v1196
      %v1198 = vsel %vm887, %v1157, 0.0
      %v1199 = vadd.f32 %v1197, %v1198
      %v1200 = vsel %vm887, %v1162, 0.0
      %v1201 = vadd.f32 %v1199, %v1200
      %v1202 = vsel %vm887, %v1167, 0.0
      %v1203 = vadd.f32 %v1201, %v1202
      %v1204 = vsel %vm887, %v1172, 0.0
      %v1205 = vadd.f32 %v1203, %v1204
      %v1206 = vrot.slane %v1205, 4
      %v1207 = vadd.f32 %v1205, %v1206
      %v1208 = vrot.slane %v1207, 2
      %v1209 = vadd.f32 %v1207, %v1208
      %v1210 = vrot.slane %v1209, 1
      %v1211 = vadd.f32 %v1209, %v1210
      %vm1212 = vcmask 122880
      %1213 = vst.msk [vmem:[%s177] sm:$0x1] %vm1212, %v1211
      %v1214 = vmul.f32 %v1097, %v1097
      %v1215 = vmul.f32 %v1102, %v1102
      %v1216 = vmul.f32 %v1107, %v1107
      %v1217 = vmul.f32 %v1112, %v1112
      %v1218 = vmul.f32 %v1117, %v1117
      %v1219 = vmul.f32 %v1122, %v1122
      %v1220 = vmul.f32 %v1127, %v1127
      %v1221 = vmul.f32 %v1132, %v1132
      %v1222 = vmul.f32 %v1137, %v1137
      %v1223 = vmul.f32 %v1142, %v1142
      %v1224 = vmul.f32 %v1147, %v1147
      %v1225 = vmul.f32 %v1152, %v1152
      %v1226 = vmul.f32 %v1157, %v1157
      %v1227 = vmul.f32 %v1162, %v1162
      %v1228 = vmul.f32 %v1167, %v1167
      %v1229 = vmul.f32 %v1172, %v1172
      %v1230 = vsel %vm887, %v1214, 0.0
      %v1231 = vsel %vm887, %v1215, 0.0
      %v1232 = vadd.f32 %v1230, %v1231
      %v1233 = vsel %vm887, %v1216, 0.0
      %v1234 = vadd.f32 %v1232, %v1233
      %v1235 = vsel %vm887, %v1217, 0.0
      %v1236 = vadd.f32 %v1234, %v1235
      %v1237 = vsel %vm887, %v1218, 0.0
      %v1238 = vadd.f32 %v1236, %v1237
      %v1239 = vsel %vm887, %v1219, 0.0
      %v1240 = vadd.f32 %v1238, %v1239
      %v1241 = vsel %vm887, %v1220, 0.0
      %v1242 = vadd.f32 %v1240, %v1241
      %v1243 = vsel %vm887, %v1221, 0.0
      %v1244 = vadd.f32 %v1242, %v1243
      %v1245 = vsel %vm887, %v1222, 0.0
      %v1246 = vadd.f32 %v1244, %v1245
      %v1247 = vsel %vm887, %v1223, 0.0
      %v1248 = vadd.f32 %v1246, %v1247
      %v1249 = vsel %vm887, %v1224, 0.0
      %v1250 = vadd.f32 %v1248, %v1249
      %v1251 = vsel %vm887, %v1225, 0.0
      %v1252 = vadd.f32 %v1250, %v1251
      %v1253 = vsel %vm887, %v1226, 0.0
      %v1254 = vadd.f32 %v1252, %v1253
      %v1255 = vsel %vm887, %v1227, 0.0
      %v1256 = vadd.f32 %v1254, %v1255
      %v1257 = vsel %vm887, %v1228, 0.0
      %v1258 = vadd.f32 %v1256, %v1257
      %v1259 = vsel %vm887, %v1229, 0.0
      %v1260 = vadd.f32 %v1258, %v1259
      %v1261 = vrot.slane %v1260, 4
      %v1262 = vadd.f32 %v1260, %v1261
      %v1263 = vrot.slane %v1262, 2
      %v1264 = vadd.f32 %v1262, %v1263
      %v1265 = vrot.slane %v1264, 1
      %v1266 = vadd.f32 %v1264, %v1265
      %1267 = vst.msk [vmem:[%s177 + $0x1] sm:$0x1] %vm1212, %v1266
      %p1268 = scmp.lt.s32.totalorder %s17, 1
      %s1269 = scalar_select %p1268, %s17, 1
      %p1270 = scmp.lt.s32.totalorder %s18, 1
      %s1271 = scalar_select %p1270, %s18, 1
      %s1272 = smul.addr %s1269, 2
      %s1273 = sadd.s32 %s1271, %s1272
      %s1274 = smul.addr %s1273, 2
      %s1275 = scalar_lea.vmem %s2, %s1274
      // Predicated region
      $region29: #{block_forward.2} parent=27 // pred_check
        %p1276 = pneg %p94
      $region30: #{block_forward.2} parent=27 // pred_check_branch
        %1278 = sbr.rel (%p1276) target = $region32
      $region31: #{block_forward.2} parent=27 // pred_region
        _
      $region32: #{block_forward.2} parent=27 // pred_fallthru
        _
    $region28: #{block_forward.2} parent=5 // pred_fallthru
      _
    %p1279 = scmp.le.s32.totalorder 2, %s8
    // Predicated region
    $region33: #{block_forward.2} parent=5 // pred_check
      %p1280 = pneg %p1279
    $region34: #{block_forward.2} parent=5 // pred_check_branch
      %1282 = sbr.rel (%p1280) target = $region36
    $region35: #{block_forward.2} parent=5 // pred_region
      %s1283 = ssub.s32 %s8, 2
      // Predicated region
      $region37: #{block_forward.2} parent=35 // pred_check
        %p1284 = pneg %p100
      $region38: #{block_forward.2} parent=35 // pred_check_branch
        %1286 = sbr.rel (%p1284) target = $region40
      $region39: #{block_forward.2} parent=35 // pred_region
        %p1287 = scmp.lt.s32.totalorder %s19, 1
        %s1288 = scalar_select %p1287, %s19, 1
        %p1289 = scmp.lt.s32.totalorder %s20, 1
        %s1290 = scalar_select %p1289, %s20, 1
        %s1291 = smul.addr %s1288, 2
        %s1292 = sadd.s32 %s1290, %s1291
        %s1293 = smul.addr %s1292, 2
        %s1294 = scalar_lea.vmem %s2, %s1293
      $region40: #{block_forward.2} parent=35 // pred_fallthru
        _
    $region36: #{block_forward.2} parent=5 // pred_fallthru
      _
  $region6: #{block_forward.2} parent=0 // loop_footer
    %s12 = sadd.s32 1, %s8
  $region7: #{block_forward.2} parent=0 // loop_footer_branch
    %7 = sbr.rel target = $region3
  $region8: #{block_forward.2} parent=0 // loop_exit
    _

// kernel: block_forward.3
$region0: #{block_forward.3}
  #allocation0 [shape = 'u32[]', space=smem, size = 0x4, offset = 0x4, fixed_abs, tag = 'smem constant byte address 0x4 - core index']
  #allocation1 [shape = 'u32[144,128]{1,0:T(1,128)}', space=vmem, size = 0x12000, scoped, tag = 'internal scratch']
  %s0 = inlined_call_operand.vmem [shape: f32[2,2,10,18,4], index: 0, kind: input, shape index: {}]
  %s1 = inlined_call_operand.vmem [shape: f32[36,16], index: 1, kind: input, shape index: {}]
  %s2 = inlined_call_operand.vmem [shape: f32[16,4], index: 2, kind: input, shape index: {}]
  %s3 = inlined_call_operand.vmem [shape: f32[1,4], index: 3, kind: input, shape index: {}]
  %s4 = inlined_call_operand.vmem [shape: f32[2,2,128,4], index: 4, kind: output, shape index: {}]
  %s5 = sld [smem:[#allocation0]]
  $region49: #{block_forward.3} parent=0
    _
  %s7 = ssub.s32 1, %s5
  %s8 = scalar_select 0, %s7, %s5
  loop: start=0, step=1, limit=6
  $region2: #{block_forward.3} parent=0 // loop_pre_header
    _
  $region3: #{block_forward.3} parent=0 // loop_header
    %s10 = sphi 0, %s14
    %p11 = scmp.ge.s32.totalorder %s10, 6
    %s17 = sphi 0, %s29
    %s18 = sphi 0, %s25
    %s19 = sphi 0, %s17
    %s20 = sphi 0, %s18
    %s21 = sphi 0, %s19
    %s22 = sphi 0, %s20
    %s34 = sphi 0, %s36
    %s37 = sphi 0, %s34
    %s38 = sphi 0, %s37
    %s54 = sphi 0, %s38
    %s58 = sphi 0, %s58
    %s60 = sphi 0, %s58
    %s61 = sphi 0, %s60
    %s75 = sphi 0, %s61
    %s79 = sphi 0, %s79
    %s81 = sphi 0, %s79
    %s82 = sphi 0, %s81
    %s96 = sphi 0, %s82
    %s100 = sphi 0, %s100
    %s102 = sphi 0, %s100
    %s103 = sphi 0, %s102
    %s117 = sphi 0, %s103
    %s125 = sphi 0, %s127
    %s128 = sphi 0, %s125
    %s129 = sphi 0, %s128
    %s145 = sphi 0, %s129
  $region4: #{block_forward.3} parent=0 // loop_header_branch
    %13 = sbr.rel (%p11) target = $region8
  $region5: #{block_forward.3} parent=0 // loop_body
    %s15 = ssub.s32 %s10, 1
    %s16 = ssub.s32 %s10, 2
    %s23 = sadd.s32 1, %s18
    %p24 = scmp.ge.s32.totalorder %s23, 2
    %s25 = scalar_select %p24, 0, %s23
    %s26 = sadd.s32 1, %s17
    %s27 = scalar_select %p24, %s26, %s17
    %p28 = scmp.ge.s32.totalorder %s27, 2
    %s29 = scalar_select %p28, 0, %s27
    %s30 = ssub.s32 %s17, %s29
    %s31 = ssub.s32 %s18, %s25
    %s32 = sor.u32 %s30, %s31
    %p33 = scmp.eq.s32.totalorder %s32, 0
    %s35 = sadd.s32 %s34, 1
    %s36 = scalar_select %p33, %s34, %s35
    %p39 = pneg %p33
    %p40 = scmp.eq.s32.totalorder %s10, 3
    %p41 = por %p39, %p40
    %p42 = scmp.ne.s32.totalorder %s34, %s37
    %p43 = scmp.eq.s32.totalorder %s10, 0
    %p44 = por %p42, %p43
    %p45 = scmp.ne.s32.totalorder %s34, %s37
    %p46 = scmp.eq.s32.totalorder %s15, 3
    %p47 = por %p45, %p46
    %p48 = scmp.ne.s32.totalorder %s37, %s38
    %p49 = scmp.eq.s32.totalorder %s15, 0
    %p50 = por %p48, %p49
    %p51 = scmp.ne.s32.totalorder %s37, %s38
    %p52 = scmp.eq.s32.totalorder %s16, 3
    %p53 = por %p51, %p52
    %p55 = scmp.ne.s32.totalorder %s38, %s54
    %p56 = scmp.eq.s32.totalorder %s16, 0
    %p57 = por %p55, %p56
    %s59 = sadd.s32 %s58, 1
    %p62 = scmp.eq.s32.totalorder %s10, 3
    %p63 = scmp.ne.s32.totalorder %s58, %s60
    %p64 = scmp.eq.s32.totalorder %s10, 0
    %p65 = por %p63, %p64
    %p66 = scmp.ne.s32.totalorder %s58, %s60
    %p67 = scmp.eq.s32.totalorder %s15, 3
    %p68 = por %p66, %p67
    %p69 = scmp.ne.s32.totalorder %s60, %s61
    %p70 = scmp.eq.s32.totalorder %s15, 0
    %p71 = por %p69, %p70
    %p72 = scmp.ne.s32.totalorder %s60, %s61
    %p73 = scmp.eq.s32.totalorder %s16, 3
    %p74 = por %p72, %p73
    %p76 = scmp.ne.s32.totalorder %s61, %s75
    %p77 = scmp.eq.s32.totalorder %s16, 0
    %p78 = por %p76, %p77
    %s80 = sadd.s32 %s79, 1
    %p83 = scmp.eq.s32.totalorder %s10, 3
    %p84 = scmp.ne.s32.totalorder %s79, %s81
    %p85 = scmp.eq.s32.totalorder %s10, 0
    %p86 = por %p84, %p85
    %p87 = scmp.ne.s32.totalorder %s79, %s81
    %p88 = scmp.eq.s32.totalorder %s15, 3
    %p89 = por %p87, %p88
    %p90 = scmp.ne.s32.totalorder %s81, %s82
    %p91 = scmp.eq.s32.totalorder %s15, 0
    %p92 = por %p90, %p91
    %p93 = scmp.ne.s32.totalorder %s81, %s82
    %p94 = scmp.eq.s32.totalorder %s16, 3
    %p95 = por %p93, %p94
    %p97 = scmp.ne.s32.totalorder %s82, %s96
    %p98 = scmp.eq.s32.totalorder %s16, 0
    %p99 = por %p97, %p98
    %s101 = sadd.s32 %s100, 1
    %p104 = scmp.eq.s32.totalorder %s10, 3
    %p105 = scmp.ne.s32.totalorder %s100, %s102
    %p106 = scmp.eq.s32.totalorder %s10, 0
    %p107 = por %p105, %p106
    %p108 = scmp.ne.s32.totalorder %s100, %s102
    %p109 = scmp.eq.s32.totalorder %s15, 3
    %p110 = por %p108, %p109
    %p111 = scmp.ne.s32.totalorder %s102, %s103
    %p112 = scmp.eq.s32.totalorder %s15, 0
    %p113 = por %p111, %p112
    %p114 = scmp.ne.s32.totalorder %s102, %s103
    %p115 = scmp.eq.s32.totalorder %s16, 3
    %p116 = por %p114, %p115
    %p118 = scmp.ne.s32.totalorder %s103, %s117
    %p119 = scmp.eq.s32.totalorder %s16, 0
    %p120 = por %p118, %p119
    %s121 = ssub.s32 %s17, %s29
    %s122 = ssub.s32 %s18, %s25
    %s123 = sor.u32 %s121, %s122
    %p124 = scmp.eq.s32.totalorder %s123, 0
    %s126 = sadd.s32 %s125, 1
    %s127 = scalar_select %p124, %s125, %s126
    %p130 = pneg %p124
    %p131 = scmp.eq.s32.totalorder %s10, 3
    %p132 = por %p130, %p131
    %p133 = scmp.ne.s32.totalorder %s125, %s128
    %p134 = scmp.eq.s32.totalorder %s10, 0
    %p135 = por %p133, %p134
    %p136 = scmp.ne.s32.totalorder %s125, %s128
    %p137 = scmp.eq.s32.totalorder %s15, 3
    %p138 = por %p136, %p137
    %p139 = scmp.ne.s32.totalorder %s128, %s129
    %p140 = scmp.eq.s32.totalorder %s15, 0
    %p141 = por %p139, %p140
    %p142 = scmp.ne.s32.totalorder %s128, %s129
    %p143 = scmp.eq.s32.totalorder %s16, 3
    %p144 = por %p142, %p143
    %p146 = scmp.ne.s32.totalorder %s129, %s145
    %p147 = scmp.eq.s32.totalorder %s16, 0
    %p148 = por %p146, %p147
    %p149 = scmp.le.s32.totalorder 1, %s10
    %p150 = scmp.lt.s32.totalorder %s10, 5
    %p151 = pnand %p149, %p150
    %p152 = pneg %p151
    // Predicated region
    $region9: #{block_forward.3} parent=5 // pred_check
      _
    $region10: #{block_forward.3} parent=5 // pred_check_branch
      %154 = sbr.rel (%p151) target = $region12
    $region11: #{block_forward.3} parent=5 // pred_region
      %s155 = ssub.s32 %s10, 1
      // Predicated region
      $region13: #{block_forward.3} parent=11 // pred_check
        %p156 = pneg %p71
      $region14: #{block_forward.3} parent=11 // pred_check_branch
        %158 = sbr.rel (%p156) target = $region16
      $region15: #{block_forward.3} parent=11 // pred_region
        _
      $region16: #{block_forward.3} parent=11 // pred_fallthru
        _
      // Predicated region
      $region17: #{block_forward.3} parent=11 // pred_check
        %p159 = pneg %p92
      $region18: #{block_forward.3} parent=11 // pred_check_branch
        %161 = sbr.rel (%p159) target = $region20
      $region19: #{block_forward.3} parent=11 // pred_region
        _
      $region20: #{block_forward.3} parent=11 // pred_fallthru
        _
      // Predicated region
      $region21: #{block_forward.3} parent=11 // pred_check
        %p162 = pneg %p113
      $region22: #{block_forward.3} parent=11 // pred_check_branch
        %164 = sbr.rel (%p162) target = $region24
      $region23: #{block_forward.3} parent=11 // pred_region
        _
      $region24: #{block_forward.3} parent=11 // pred_fallthru
        _
    $region12: #{block_forward.3} parent=5 // pred_fallthru
      _
    %p165 = scmp.lt.s32.totalorder %s10, 4
    // Predicated region
    $region25: #{block_forward.3} parent=5 // pred_check
      %p166 = pneg %p165
    $region26: #{block_forward.3} parent=5 // pred_check_branch
      %168 = sbr.rel (%p166) target = $region28
    $region27: #{block_forward.3} parent=5 // pred_region
      // Predicated region
      $region29: #{block_forward.3} parent=27 // pred_check
        %p169 = pneg %p44
      $region30: #{block_forward.3} parent=27 // pred_check_branch
        %171 = sbr.rel (%p169) target = $region32
      $region31: #{block_forward.3} parent=27 // pred_region
        %p172 = scmp.lt.s32.totalorder %s17, 1
        %s173 = scalar_select %p172, %s17, 1
        %p174 = scmp.lt.s32.totalorder %s18, 1
        %s175 = scalar_select %p174, %s18, 1
        %s176 = smul.addr %s175, 30
        %s177 = smul.addr %s173, 60
        %s178 = sadd.s32 %s176, %s177
        %s179 = smul.addr %s178, 8
        %s180 = scalar_lea.vmem %s0, %s179
      $region32: #{block_forward.3} parent=27 // pred_fallthru
        _
    $region28: #{block_forward.3} parent=5 // pred_fallthru
      _
    %p181 = scmp.le.s32.totalorder 1, %s10
    %p182 = scmp.lt.s32.totalorder %s10, 5
    %p183 = pnand %p181, %p182
    %p184 = pneg %p183
    // Predicated region
    $region33: #{block_forward.3} parent=5 // pred_check
      _
    $region34: #{block_forward.3} parent=5 // pred_check_branch
      %186 = sbr.rel (%p183) target = $region36
    $region35: #{block_forward.3} parent=5 // pred_region
      %s187 = ssub.s32 %s10, 1
      %p188 = scmp.lt.s32.totalorder %s19, 1
      %s189 = scalar_select %p188, %s19, 1
      %p190 = scmp.lt.s32.totalorder %s20, 1
      %s191 = scalar_select %p190, %s20, 1
      %s192 = smul.addr %s191, 30
      %s193 = smul.addr %s189, 60
      %s194 = sadd.s32 %s192, %s193
      %s195 = smul.addr %s194, 8
      %s196 = scalar_lea.vmem %s0, %s195
      %p197 = pneg %p50
      %p198 = pneg %p47
      %p199 = pneg %p71
      %p200 = pneg %p68
      %p201 = pneg %p92
      %p202 = pneg %p89
      %p203 = pneg %p113
      %p204 = pneg %p110
      %p205 = pneg %p141
      %p206 = pneg %p138
      %p207 = scmp.lt.s32.totalorder %s19, 1
      %s208 = scalar_select %p207, %s19, 1
      %p209 = scmp.lt.s32.totalorder %s20, 1
      %s210 = scalar_select %p209, %s20, 1
      %s211 = smul.addr %s210, 16
      %s212 = smul.addr %s208, 32
      %s213 = sadd.s32 %s211, %s212
      %s214 = smul.addr %s213, 8
      %s215 = scalar_lea.vmem %s4, %s214
      %p216 = scmp.lt.s32.totalorder %s19, 1
      %s217 = scalar_select %p216, %s19, 1
      %p218 = scmp.lt.s32.totalorder %s20, 1
      %s219 = scalar_select %p218, %s20, 1
      %s220 = smul.addr %s219, 30
      %s221 = smul.addr %s217, 60
      %s222 = sadd.s32 %s220, %s221
      %s223 = smul.addr %s222, 8
      %s224 = scalar_lea.vmem %s0, %s223
      %p225 = scmp.lt.s32.totalorder %s19, 1
      %s226 = scalar_select %p225, %s19, 1
      %p227 = scmp.lt.s32.totalorder %s20, 1
      %s228 = scalar_select %p227, %s20, 1
      %s229 = smul.addr %s228, 16
      %s230 = smul.addr %s226, 32
      %s231 = sadd.s32 %s229, %s230
      %s232 = smul.addr %s231, 8
      %s233 = scalar_lea.vmem %s4, %s232
      %v234 = vld [vmem:[%s224] sm:$0xff]
      %v235 = vld [vmem:[%s224 + $0x8] sm:$0xff]
      %v236 = vld [vmem:[%s224 + $0x18] sm:$0xff]
      %v237 = vld [vmem:[%s224 + $0x20] sm:$0xff]
      %v238 = vld [vmem:[%s224 + $0x30] sm:$0xff]
      %v239 = vld [vmem:[%s224 + $0x38] sm:$0xff]
      %v240 = vld [vmem:[%s224 + $0x48] sm:$0xff]
      %v241 = vld [vmem:[%s224 + $0x50] sm:$0xff]
      %v242 = vld [vmem:[%s224 + $0x60] sm:$0xff]
      %v243 = vld [vmem:[%s224 + $0x68] sm:$0xff]
      %v244 = vld [vmem:[%s224 + $0x78] sm:$0xff]
      %v245 = vld [vmem:[%s224 + $0x80] sm:$0xff]
      %v246 = vld [vmem:[%s224 + $0x90] sm:$0xff]
      %v247 = vld [vmem:[%s224 + $0x98] sm:$0xff]
      %v248 = vld [vmem:[%s224 + $0xa8] sm:$0xff]
      %v249 = vld [vmem:[%s224 + $0xb0] sm:$0xff]
      %v250 = vld [vmem:[%s224 + $0x1] sm:$0xff]
      %v251 = vld [vmem:[%s224 + $0x9] sm:$0xff]
      %v252 = vld [vmem:[%s224 + $0x19] sm:$0xff]
      %v253 = vld [vmem:[%s224 + $0x21] sm:$0xff]
      %v254 = vld [vmem:[%s224 + $0x31] sm:$0xff]
      %v255 = vld [vmem:[%s224 + $0x39] sm:$0xff]
      %v256 = vld [vmem:[%s224 + $0x49] sm:$0xff]
      %v257 = vld [vmem:[%s224 + $0x51] sm:$0xff]
      %v258 = vld [vmem:[%s224 + $0x61] sm:$0xff]
      %v259 = vld [vmem:[%s224 + $0x69] sm:$0xff]
      %v260 = vld [vmem:[%s224 + $0x79] sm:$0xff]
      %v261 = vld [vmem:[%s224 + $0x81] sm:$0xff]
      %v262 = vld [vmem:[%s224 + $0x91] sm:$0xff]
      %v263 = vld [vmem:[%s224 + $0x99] sm:$0xff]
      %v264 = vld [vmem:[%s224 + $0xa9] sm:$0xff]
      %v265 = vld [vmem:[%s224 + $0xb1] sm:$0xff]
      %v266 = vld [vmem:[%s224 + $0x2] sm:$0xff]
      %v267 = vld [vmem:[%s224 + $0xa] sm:$0xff]
      %v268 = vld [vmem:[%s224 + $0x1a] sm:$0xff]
      %v269 = vld [vmem:[%s224 + $0x22] sm:$0xff]
      %v270 = vld [vmem:[%s224 + $0x32] sm:$0xff]
      %v271 = vld [vmem:[%s224 + $0x3a] sm:$0xff]
      %v272 = vld [vmem:[%s224 + $0x4a] sm:$0xff]
      %v273 = vld [vmem:[%s224 + $0x52] sm:$0xff]
      %v274 = vld [vmem:[%s224 + $0x62] sm:$0xff]
      %v275 = vld [vmem:[%s224 + $0x6a] sm:$0xff]
      %v276 = vld [vmem:[%s224 + $0x7a] sm:$0xff]
      %v277 = vld [vmem:[%s224 + $0x82] sm:$0xff]
      %v278 = vld [vmem:[%s224 + $0x92] sm:$0xff]
      %v279 = vld [vmem:[%s224 + $0x9a] sm:$0xff]
      %v280 = vld [vmem:[%s224 + $0xaa] sm:$0xff]
      %v281 = vld [vmem:[%s224 + $0xb2] sm:$0xff]
      %s282 = scalar_lea.vmem %s224, 24
      %v283 = vld [vmem:[%s282] sm:$0xff]
      %v284 = vld [vmem:[%s282 + $0x8] sm:$0xff]
      %v285 = vld [vmem:[%s282 + $0x18] sm:$0xff]
      %v286 = vld [vmem:[%s282 + $0x20] sm:$0xff]
      %v287 = vld [vmem:[%s282 + $0x30] sm:$0xff]
      %v288 = vld [vmem:[%s282 + $0x38] sm:$0xff]
      %v289 = vld [vmem:[%s282 + $0x48] sm:$0xff]
      %v290 = vld [vmem:[%s282 + $0x50] sm:$0xff]
      %v291 = vld [vmem:[%s282 + $0x60] sm:$0xff]
      %v292 = vld [vmem:[%s282 + $0x68] sm:$0xff]
      %v293 = vld [vmem:[%s282 + $0x78] sm:$0xff]
      %v294 = vld [vmem:[%s282 + $0x80] sm:$0xff]
      %v295 = vld [vmem:[%s282 + $0x90] sm:$0xff]
      %v296 = vld [vmem:[%s282 + $0x98] sm:$0xff]
      %v297 = vld [vmem:[%s282 + $0xa8] sm:$0xff]
      %v298 = vld [vmem:[%s282 + $0xb0] sm:$0xff]
      %v299 = vld [vmem:[%s282 + $0x1] sm:$0xff]
      %v300 = vld [vmem:[%s282 + $0x9] sm:$0xff]
      %v301 = vld [vmem:[%s282 + $0x19] sm:$0xff]
      %v302 = vld [vmem:[%s282 + $0x21] sm:$0xff]
      %v303 = vld [vmem:[%s282 + $0x31] sm:$0xff]
      %v304 = vld [vmem:[%s282 + $0x39] sm:$0xff]
      %v305 = vld [vmem:[%s282 + $0x49] sm:$0xff]
      %v306 = vld [vmem:[%s282 + $0x51] sm:$0xff]
      %v307 = vld [vmem:[%s282 + $0x61] sm:$0xff]
      %v308 = vld [vmem:[%s282 + $0x69] sm:$0xff]
      %v309 = vld [vmem:[%s282 + $0x79] sm:$0xff]
      %v310 = vld [vmem:[%s282 + $0x81] sm:$0xff]
      %v311 = vld [vmem:[%s282 + $0x91] sm:$0xff]
      %v312 = vld [vmem:[%s282 + $0x99] sm:$0xff]
      %v313 = vld [vmem:[%s282 + $0xa9] sm:$0xff]
      %v314 = vld [vmem:[%s282 + $0xb1] sm:$0xff]
      %v315 = vld [vmem:[%s282 + $0x2] sm:$0xff]
      %v316 = vld [vmem:[%s282 + $0xa] sm:$0xff]
      %v317 = vld [vmem:[%s282 + $0x1a] sm:$0xff]
      %v318 = vld [vmem:[%s282 + $0x22] sm:$0xff]
      %v319 = vld [vmem:[%s282 + $0x32] sm:$0xff]
      %v320 = vld [vmem:[%s282 + $0x3a] sm:$0xff]
      %v321 = vld [vmem:[%s282 + $0x4a] sm:$0xff]
      %v322 = vld [vmem:[%s282 + $0x52] sm:$0xff]
      %v323 = vld [vmem:[%s282 + $0x62] sm:$0xff]
      %v324 = vld [vmem:[%s282 + $0x6a] sm:$0xff]
      %v325 = vld [vmem:[%s282 + $0x7a] sm:$0xff]
      %v326 = vld [vmem:[%s282 + $0x82] sm:$0xff]
      %v327 = vld [vmem:[%s282 + $0x92] sm:$0xff]
      %v328 = vld [vmem:[%s282 + $0x9a] sm:$0xff]
      %v329 = vld [vmem:[%s282 + $0xaa] sm:$0xff]
      %v330 = vld [vmem:[%s282 + $0xb2] sm:$0xff]
      %s331 = scalar_lea.vmem %s224, 48
      %v332 = vld [vmem:[%s331] sm:$0xff]
      %v333 = vld [vmem:[%s331 + $0x8] sm:$0xff]
      %v334 = vld [vmem:[%s331 + $0x18] sm:$0xff]
      %v335 = vld [vmem:[%s331 + $0x20] sm:$0xff]
      %v336 = vld [vmem:[%s331 + $0x30] sm:$0xff]
      %v337 = vld [vmem:[%s331 + $0x38] sm:$0xff]
      %v338 = vld [vmem:[%s331 + $0x48] sm:$0xff]
      %v339 = vld [vmem:[%s331 + $0x50] sm:$0xff]
      %v340 = vld [vmem:[%s331 + $0x60] sm:$0xff]
      %v341 = vld [vmem:[%s331 + $0x68] sm:$0xff]
      %v342 = vld [vmem:[%s331 + $0x78] sm:$0xff]
      %v343 = vld [vmem:[%s331 + $0x80] sm:$0xff]
      %v344 = vld [vmem:[%s331 + $0x90] sm:$0xff]
      %v345 = vld [vmem:[%s331 + $0x98] sm:$0xff]
      %v346 = vld [vmem:[%s331 + $0xa8] sm:$0xff]
      %v347 = vld [vmem:[%s331 + $0xb0] sm:$0xff]
      %v348 = vld [vmem:[%s331 + $0x1] sm:$0xff]
      %v349 = vld [vmem:[%s331 + $0x9] sm:$0xff]
      %v350 = vld [vmem:[%s331 + $0x19] sm:$0xff]
      %v351 = vld [vmem:[%s331 + $0x21] sm:$0xff]
      %v352 = vld [vmem:[%s331 + $0x31] sm:$0xff]
      %v353 = vld [vmem:[%s331 + $0x39] sm:$0xff]
      %v354 = vld [vmem:[%s331 + $0x49] sm:$0xff]
      %v355 = vld [vmem:[%s331 + $0x51] sm:$0xff]
      %v356 = vld [vmem:[%s331 + $0x61] sm:$0xff]
      %v357 = vld [vmem:[%s331 + $0x69] sm:$0xff]
      %v358 = vld [vmem:[%s331 + $0x79] sm:$0xff]
      %v359 = vld [vmem:[%s331 + $0x81] sm:$0xff]
      %v360 = vld [vmem:[%s331 + $0x91] sm:$0xff]
      %v361 = vld [vmem:[%s331 + $0x99] sm:$0xff]
      %v362 = vld [vmem:[%s331 + $0xa9] sm:$0xff]
      %v363 = vld [vmem:[%s331 + $0xb1] sm:$0xff]
      %v364 = vld [vmem:[%s331 + $0x2] sm:$0xff]
      %v365 = vld [vmem:[%s331 + $0xa] sm:$0xff]
      %v366 = vld [vmem:[%s331 + $0x1a] sm:$0xff]
      %v367 = vld [vmem:[%s331 + $0x22] sm:$0xff]
      %v368 = vld [vmem:[%s331 + $0x32] sm:$0xff]
      %v369 = vld [vmem:[%s331 + $0x3a] sm:$0xff]
      %v370 = vld [vmem:[%s331 + $0x4a] sm:$0xff]
      %v371 = vld [vmem:[%s331 + $0x52] sm:$0xff]
      %v372 = vld [vmem:[%s331 + $0x62] sm:$0xff]
      %v373 = vld [vmem:[%s331 + $0x6a] sm:$0xff]
      %v374 = vld [vmem:[%s331 + $0x7a] sm:$0xff]
      %v375 = vld [vmem:[%s331 + $0x82] sm:$0xff]
      %v376 = vld [vmem:[%s331 + $0x92] sm:$0xff]
      %v377 = vld [vmem:[%s331 + $0x9a] sm:$0xff]
      %v378 = vld [vmem:[%s331 + $0xaa] sm:$0xff]
      %v379 = vld [vmem:[%s331 + $0xb2] sm:$0xff]
      %396 = vrot.lane.b32.xlu0 %v250, 4
      %v397 = vpop.permute.xlu0 %396
      %398 = vrot.lane.b32.xlu0 %v251, 4
      %v399 = vpop.permute.xlu0 %398
      %400 = vrot.lane.b32.xlu0 %v252, 4
      %v401 = vpop.permute.xlu0 %400
      %402 = vrot.lane.b32.xlu0 %v253, 4
      %v403 = vpop.permute.xlu0 %402
      %404 = vrot.lane.b32.xlu0 %v254, 4
      %v405 = vpop.permute.xlu0 %404
      %406 = vrot.lane.b32.xlu0 %v255, 4
      %v407 = vpop.permute.xlu0 %406
      %408 = vrot.lane.b32.xlu0 %v256, 4
      %v409 = vpop.permute.xlu0 %408
      %410 = vrot.lane.b32.xlu0 %v257, 4
      %v411 = vpop.permute.xlu0 %410
      %412 = vrot.lane.b32.xlu0 %v258, 4
      %v413 = vpop.permute.xlu0 %412
      %414 = vrot.lane.b32.xlu0 %v259, 4
      %v415 = vpop.permute.xlu0 %414
      %416 = vrot.lane.b32.xlu0 %v260, 4
      %v417 = vpop.permute.xlu0 %416
      %418 = vrot.lane.b32.xlu0 %v261, 4
      %v419 = vpop.permute.xlu0 %418
      %420 = vrot.lane.b32.xlu0 %v262, 4
      %v421 = vpop.permute.xlu0 %420
      %422 = vrot.lane.b32.xlu0 %v263, 4
      %v423 = vpop.permute.xlu0 %422
      %424 = vrot.lane.b32.xlu0 %v264, 4
      %v425 = vpop.permute.xlu0 %424
      %426 = vrot.lane.b32.xlu0 %v265, 4
      %v427 = vpop.permute.xlu0 %426
      %460 = vrot.lane.b32.xlu0 %v266, 8
      %v461 = vpop.permute.xlu0 %460
      %462 = vrot.lane.b32.xlu0 %v267, 8
      %v463 = vpop.permute.xlu0 %462
      %464 = vrot.lane.b32.xlu0 %v268, 8
      %v465 = vpop.permute.xlu0 %464
      %466 = vrot.lane.b32.xlu0 %v269, 8
      %v467 = vpop.permute.xlu0 %466
      %468 = vrot.lane.b32.xlu0 %v270, 8
      %v469 = vpop.permute.xlu0 %468
      %470 = vrot.lane.b32.xlu0 %v271, 8
      %v471 = vpop.permute.xlu0 %470
      %472 = vrot.lane.b32.xlu0 %v272, 8
      %v473 = vpop.permute.xlu0 %472
      %474 = vrot.lane.b32.xlu0 %v273, 8
      %v475 = vpop.permute.xlu0 %474
      %476 = vrot.lane.b32.xlu0 %v274, 8
      %v477 = vpop.permute.xlu0 %476
      %478 = vrot.lane.b32.xlu0 %v275, 8
      %v479 = vpop.permute.xlu0 %478
      %480 = vrot.lane.b32.xlu0 %v276, 8
      %v481 = vpop.permute.xlu0 %480
      %482 = vrot.lane.b32.xlu0 %v277, 8
      %v483 = vpop.permute.xlu0 %482
      %484 = vrot.lane.b32.xlu0 %v278, 8
      %v485 = vpop.permute.xlu0 %484
      %486 = vrot.lane.b32.xlu0 %v279, 8
      %v487 = vpop.permute.xlu0 %486
      %488 = vrot.lane.b32.xlu0 %v280, 8
      %v489 = vpop.permute.xlu0 %488
      %490 = vrot.lane.b32.xlu0 %v281, 8
      %v491 = vpop.permute.xlu0 %490
      %524 = vrot.lane.b32.xlu0 %v283, 12
      %v525 = vpop.permute.xlu0 %524
      %526 = vrot.lane.b32.xlu0 %v284, 12
      %v527 = vpop.permute.xlu0 %526
      %528 = vrot.lane.b32.xlu0 %v285, 12
      %v529 = vpop.permute.xlu0 %528
      %530 = vrot.lane.b32.xlu0 %v286, 12
      %v531 = vpop.permute.xlu0 %530
      %532 = vrot.lane.b32.xlu0 %v287, 12
      %v533 = vpop.permute.xlu0 %532
      %534 = vrot.lane.b32.xlu0 %v288, 12
      %v535 = vpop.permute.xlu0 %534
      %536 = vrot.lane.b32.xlu0 %v289, 12
      %v537 = vpop.permute.xlu0 %536
      %538 = vrot.lane.b32.xlu0 %v290, 12
      %v539 = vpop.permute.xlu0 %538
      %540 = vrot.lane.b32.xlu0 %v291, 12
      %v541 = vpop.permute.xlu0 %540
      %542 = vrot.lane.b32.xlu0 %v292, 12
      %v543 = vpop.permute.xlu0 %542
      %544 = vrot.lane.b32.xlu0 %v293, 12
      %v545 = vpop.permute.xlu0 %544
      %546 = vrot.lane.b32.xlu0 %v294, 12
      %v547 = vpop.permute.xlu0 %546
      %548 = vrot.lane.b32.xlu0 %v295, 12
      %v549 = vpop.permute.xlu0 %548
      %550 = vrot.lane.b32.xlu0 %v296, 12
      %v551 = vpop.permute.xlu0 %550
      %552 = vrot.lane.b32.xlu0 %v297, 12
      %v553 = vpop.permute.xlu0 %552
      %554 = vrot.lane.b32.xlu0 %v298, 12
      %v555 = vpop.permute.xlu0 %554
      %588 = vrot.lane.b32.xlu0 %v299, 16
      %v589 = vpop.permute.xlu0 %588
      %590 = vrot.lane.b32.xlu0 %v300, 16
      %v591 = vpop.permute.xlu0 %590
      %592 = vrot.lane.b32.xlu0 %v301, 16
      %v593 = vpop.permute.xlu0 %592
      %594 = vrot.lane.b32.xlu0 %v302, 16
      %v595 = vpop.permute.xlu0 %594
      %596 = vrot.lane.b32.xlu0 %v303, 16
      %v597 = vpop.permute.xlu0 %596
      %598 = vrot.lane.b32.xlu0 %v304, 16
      %v599 = vpop.permute.xlu0 %598
      %600 = vrot.lane.b32.xlu0 %v305, 16
      %v601 = vpop.permute.xlu0 %600
      %602 = vrot.lane.b32.xlu0 %v306, 16
      %v603 = vpop.permute.xlu0 %602
      %604 = vrot.lane.b32.xlu0 %v307, 16
      %v605 = vpop.permute.xlu0 %604
      %606 = vrot.lane.b32.xlu0 %v308, 16
      %v607 = vpop.permute.xlu0 %606
      %608 = vrot.lane.b32.xlu0 %v309, 16
      %v609 = vpop.permute.xlu0 %608
      %610 = vrot.lane.b32.xlu0 %v310, 16
      %v611 = vpop.permute.xlu0 %610
      %612 = vrot.lane.b32.xlu0 %v311, 16
      %v613 = vpop.permute.xlu0 %612
      %614 = vrot.lane.b32.xlu0 %v312, 16
      %v615 = vpop.permute.xlu0 %614
      %616 = vrot.lane.b32.xlu0 %v313, 16
      %v617 = vpop.permute.xlu0 %616
      %618 = vrot.lane.b32.xlu0 %v314, 16
      %v619 = vpop.permute.xlu0 %618
      %652 = vrot.lane.b32.xlu0 %v315, 20
      %v653 = vpop.permute.xlu0 %652
      %654 = vrot.lane.b32.xlu0 %v316, 20
      %v655 = vpop.permute.xlu0 %654
      %656 = vrot.lane.b32.xlu0 %v317, 20
      %v657 = vpop.permute.xlu0 %656
      %658 = vrot.lane.b32.xlu0 %v318, 20
      %v659 = vpop.permute.xlu0 %658
      %660 = vrot.lane.b32.xlu0 %v319, 20
      %v661 = vpop.permute.xlu0 %660
      %662 = vrot.lane.b32.xlu0 %v320, 20
      %v663 = vpop.permute.xlu0 %662
      %664 = vrot.lane.b32.xlu0 %v321, 20
      %v665 = vpop.permute.xlu0 %664
      %666 = vrot.lane.b32.xlu0 %v322, 20
      %v667 = vpop.permute.xlu0 %666
      %668 = vrot.lane.b32.xlu0 %v323, 20
      %v669 = vpop.permute.xlu0 %668
      %670 = vrot.lane.b32.xlu0 %v324, 20
      %v671 = vpop.permute.xlu0 %670
      %672 = vrot.lane.b32.xlu0 %v325, 20
      %v673 = vpop.permute.xlu0 %672
      %674 = vrot.lane.b32.xlu0 %v326, 20
      %v675 = vpop.permute.xlu0 %674
      %676 = vrot.lane.b32.xlu0 %v327, 20
      %v677 = vpop.permute.xlu0 %676
      %678 = vrot.lane.b32.xlu0 %v328, 20
      %v679 = vpop.permute.xlu0 %678
      %680 = vrot.lane.b32.xlu0 %v329, 20
      %v681 = vpop.permute.xlu0 %680
      %682 = vrot.lane.b32.xlu0 %v330, 20
      %v683 = vpop.permute.xlu0 %682
      %716 = vrot.lane.b32.xlu0 %v332, 24
      %v717 = vpop.permute.xlu0 %716
      %718 = vrot.lane.b32.xlu0 %v333, 24
      %v719 = vpop.permute.xlu0 %718
      %720 = vrot.lane.b32.xlu0 %v334, 24
      %v721 = vpop.permute.xlu0 %720
      %722 = vrot.lane.b32.xlu0 %v335, 24
      %v723 = vpop.permute.xlu0 %722
      %724 = vrot.lane.b32.xlu0 %v336, 24
      %v725 = vpop.permute.xlu0 %724
      %726 = vrot.lane.b32.xlu0 %v337, 24
      %v727 = vpop.permute.xlu0 %726
      %728 = vrot.lane.b32.xlu0 %v338, 24
      %v729 = vpop.permute.xlu0 %728
      %730 = vrot.lane.b32.xlu0 %v339, 24
      %v731 = vpop.permute.xlu0 %730
      %732 = vrot.lane.b32.xlu0 %v340, 24
      %v733 = vpop.permute.xlu0 %732
      %734 = vrot.lane.b32.xlu0 %v341, 24
      %v735 = vpop.permute.xlu0 %734
      %736 = vrot.lane.b32.xlu0 %v342, 24
      %v737 = vpop.permute.xlu0 %736
      %738 = vrot.lane.b32.xlu0 %v343, 24
      %v739 = vpop.permute.xlu0 %738
      %740 = vrot.lane.b32.xlu0 %v344, 24
      %v741 = vpop.permute.xlu0 %740
      %742 = vrot.lane.b32.xlu0 %v345, 24
      %v743 = vpop.permute.xlu0 %742
      %744 = vrot.lane.b32.xlu0 %v346, 24
      %v745 = vpop.permute.xlu0 %744
      %746 = vrot.lane.b32.xlu0 %v347, 24
      %v747 = vpop.permute.xlu0 %746
      %780 = vrot.lane.b32.xlu0 %v348, 28
      %v781 = vpop.permute.xlu0 %780
      %782 = vrot.lane.b32.xlu0 %v349, 28
      %v783 = vpop.permute.xlu0 %782
      %784 = vrot.lane.b32.xlu0 %v350, 28
      %v785 = vpop.permute.xlu0 %784
      %786 = vrot.lane.b32.xlu0 %v351, 28
      %v787 = vpop.permute.xlu0 %786
      %788 = vrot.lane.b32.xlu0 %v352, 28
      %v789 = vpop.permute.xlu0 %788
      %790 = vrot.lane.b32.xlu0 %v353, 28
      %v791 = vpop.permute.xlu0 %790
      %792 = vrot.lane.b32.xlu0 %v354, 28
      %v793 = vpop.permute.xlu0 %792
      %794 = vrot.lane.b32.xlu0 %v355, 28
      %v795 = vpop.permute.xlu0 %794
      %796 = vrot.lane.b32.xlu0 %v356, 28
      %v797 = vpop.permute.xlu0 %796
      %798 = vrot.lane.b32.xlu0 %v357, 28
      %v799 = vpop.permute.xlu0 %798
      %800 = vrot.lane.b32.xlu0 %v358, 28
      %v801 = vpop.permute.xlu0 %800
      %802 = vrot.lane.b32.xlu0 %v359, 28
      %v803 = vpop.permute.xlu0 %802
      %804 = vrot.lane.b32.xlu0 %v360, 28
      %v805 = vpop.permute.xlu0 %804
      %806 = vrot.lane.b32.xlu0 %v361, 28
      %v807 = vpop.permute.xlu0 %806
      %808 = vrot.lane.b32.xlu0 %v362, 28
      %v809 = vpop.permute.xlu0 %808
      %810 = vrot.lane.b32.xlu0 %v363, 28
      %v811 = vpop.permute.xlu0 %810
      %844 = vrot.lane.b32.xlu0 %v364, 32
      %v845 = vpop.permute.xlu0 %844
      %846 = vrot.lane.b32.xlu0 %v365, 32
      %v847 = vpop.permute.xlu0 %846
      %848 = vrot.lane.b32.xlu0 %v366, 32
      %v849 = vpop.permute.xlu0 %848
      %850 = vrot.lane.b32.xlu0 %v367, 32
      %v851 = vpop.permute.xlu0 %850
      %852 = vrot.lane.b32.xlu0 %v368, 32
      %v853 = vpop.permute.xlu0 %852
      %854 = vrot.lane.b32.xlu0 %v369, 32
      %v855 = vpop.permute.xlu0 %854
      %856 = vrot.lane.b32.xlu0 %v370, 32
      %v857 = vpop.permute.xlu0 %856
      %858 = vrot.lane.b32.xlu0 %v371, 32
      %v859 = vpop.permute.xlu0 %858
      %860 = vrot.lane.b32.xlu0 %v372, 32
      %v861 = vpop.permute.xlu0 %860
      %862 = vrot.lane.b32.xlu0 %v373, 32
      %v863 = vpop.permute.xlu0 %862
      %864 = vrot.lane.b32.xlu0 %v374, 32
      %v865 = vpop.permute.xlu0 %864
      %866 = vrot.lane.b32.xlu0 %v375, 32
      %v867 = vpop.permute.xlu0 %866
      %868 = vrot.lane.b32.xlu0 %v376, 32
      %v869 = vpop.permute.xlu0 %868
      %870 = vrot.lane.b32.xlu0 %v377, 32
      %v871 = vpop.permute.xlu0 %870
      %872 = vrot.lane.b32.xlu0 %v378, 32
      %v873 = vpop.permute.xlu0 %872
      %874 = vrot.lane.b32.xlu0 %v379, 32
      %v875 = vpop.permute.xlu0 %874
      %vm892 = vcmask 31744
      %v893 = vsel %vm892, %v234, %v397
      %v894 = vsel %vm892, %v235, %v399
      %v895 = vsel %vm892, %v236, %v401
      %v896 = vsel %vm892, %v237, %v403
      %v897 = vsel %vm892, %v238, %v405
      %v898 = vsel %vm892, %v239, %v407
      %v899 = vsel %vm892, %v240, %v409
      %v900 = vsel %vm892, %v241, %v411
      %v901 = vsel %vm892, %v242, %v413
      %v902 = vsel %vm892, %v243, %v415
      %v903 = vsel %vm892, %v244, %v417
      %v904 = vsel %vm892, %v245, %v419
      %v905 = vsel %vm892, %v246, %v421
      %v906 = vsel %vm892, %v247, %v423
      %v907 = vsel %vm892, %v248, %v425
      %v908 = vsel %vm892, %v249, %v427
      %vm909 = vcmask 64512
      %v910 = vsel %vm909, %v893, %v461
      %v911 = vsel %vm909, %v894, %v463
      %v912 = vsel %vm909, %v895, %v465
      %v913 = vsel %vm909, %v896, %v467
      %v914 = vsel %vm909, %v897, %v469
      %v915 = vsel %vm909, %v898, %v471
      %v916 = vsel %vm909, %v899, %v473
      %v917 = vsel %vm909, %v900, %v475
      %v918 = vsel %vm909, %v901, %v477
      %v919 = vsel %vm909, %v902, %v479
      %v920 = vsel %vm909, %v903, %v481
      %v921 = vsel %vm909, %v904, %v483
      %v922 = vsel %vm909, %v905, %v485
      %v923 = vsel %vm909, %v906, %v487
      %v924 = vsel %vm909, %v907, %v489
      %v925 = vsel %vm909, %v908, %v491
      %vm926 = vcmask 97280
      %v927 = vsel %vm926, %v910, %v525
      %v928 = vsel %vm926, %v911, %v527
      %v929 = vsel %vm926, %v912, %v529
      %v930 = vsel %vm926, %v913, %v531
      %v931 = vsel %vm926, %v914, %v533
      %v932 = vsel %vm926, %v915, %v535
      %v933 = vsel %vm926, %v916, %v537
      %v934 = vsel %vm926, %v917, %v539
      %v935 = vsel %vm926, %v918, %v541
      %v936 = vsel %vm926, %v919, %v543
      %v937 = vsel %vm926, %v920, %v545
      %v938 = vsel %vm926, %v921, %v547
      %v939 = vsel %vm926, %v922, %v549
      %v940 = vsel %vm926, %v923, %v551
      %v941 = vsel %vm926, %v924, %v553
      %v942 = vsel %vm926, %v925, %v555
      %vm943 = vcmask 130048
      %v944 = vsel %vm943, %v927, %v589
      %v945 = vsel %vm943, %v928, %v591
      %v946 = vsel %vm943, %v929, %v593
      %v947 = vsel %vm943, %v930, %v595
      %v948 = vsel %vm943, %v931, %v597
      %v949 = vsel %vm943, %v932, %v599
      %v950 = vsel %vm943, %v933, %v601
      %v951 = vsel %vm943, %v934, %v603
      %v952 = vsel %vm943, %v935, %v605
      %v953 = vsel %vm943, %v936, %v607
      %v954 = vsel %vm943, %v937, %v609
      %v955 = vsel %vm943, %v938, %v611
      %v956 = vsel %vm943, %v939, %v613
      %v957 = vsel %vm943, %v940, %v615
      %v958 = vsel %vm943, %v941, %v617
      %v959 = vsel %vm943, %v942, %v619
      %vm960 = vcmask 162816
      %v961 = vsel %vm960, %v944, %v653
      %v962 = vsel %vm960, %v945, %v655
      %v963 = vsel %vm960, %v946, %v657
      %v964 = vsel %vm960, %v947, %v659
      %v965 = vsel %vm960, %v948, %v661
      %v966 = vsel %vm960, %v949, %v663
      %v967 = vsel %vm960, %v950, %v665
      %v968 = vsel %vm960, %v951, %v667
      %v969 = vsel %vm960, %v952, %v669
      %v970 = vsel %vm960, %v953, %v671
      %v971 = vsel %vm960, %v954, %v673
      %v972 = vsel %vm960, %v955, %v675
      %v973 = vsel %vm960, %v956, %v677
      %v974 = vsel %vm960, %v957, %v679
      %v975 = vsel %vm960, %v958, %v681
      %v976 = vsel %vm960, %v959, %v683
      %vm977 = vcmask 195584
      %v978 = vsel %vm977, %v961, %v717
      %v979 = vsel %vm977, %v962, %v719
      %v980 = vsel %vm977, %v963, %v721
      %v981 = vsel %vm977, %v964, %v723
      %v982 = vsel %vm977, %v965, %v725
      %v983 = vsel %vm977, %v966, %v727
      %v984 = vsel %vm977, %v967, %v729
      %v985 = vsel %vm977, %v968, %v731
      %v986 = vsel %vm977, %v969, %v733
      %v987 = vsel %vm977, %v970, %v735
      %v988 = vsel %vm977, %v971, %v737
      %v989 = vsel %vm977, %v972, %v739
      %v990 = vsel %vm977, %v973, %v741
      %v991 = vsel %vm977, %v974, %v743
      %v992 = vsel %vm977, %v975, %v745
      %v993 = vsel %vm977, %v976, %v747
      %vm994 = vcmask 228352
      %v995 = vsel %vm994, %v978, %v781
      %v996 = vsel %vm994, %v979, %v783
      %v997 = vsel %vm994, %v980, %v785
      %v998 = vsel %vm994, %v981, %v787
      %v999 = vsel %vm994, %v982, %v789
      %v1000 = vsel %vm994, %v983, %v791
      %v1001 = vsel %vm994, %v984, %v793
      %v1002 = vsel %vm994, %v985, %v795
      %v1003 = vsel %vm994, %v986, %v797
      %v1004 = vsel %vm994, %v987, %v799
      %v1005 = vsel %vm994, %v988, %v801
      %v1006 = vsel %vm994, %v989, %v803
      %v1007 = vsel %vm994, %v990, %v805
      %v1008 = vsel %vm994, %v991, %v807
      %v1009 = vsel %vm994, %v992, %v809
      %v1010 = vsel %vm994, %v993, %v811
      %vm1011 = vcmask 261120
      %v1012 = vsel %vm1011, %v995, %v845
      %v1013 = vsel %vm1011, %v996, %v847
      %v1014 = vsel %vm1011, %v997, %v849
      %v1015 = vsel %vm1011, %v998, %v851
      %v1016 = vsel %vm1011, %v999, %v853
      %v1017 = vsel %vm1011, %v1000, %v855
      %v1018 = vsel %vm1011, %v1001, %v857
      %v1019 = vsel %vm1011, %v1002, %v859
      %v1020 = vsel %vm1011, %v1003, %v861
      %v1021 = vsel %vm1011, %v1004, %v863
      %v1022 = vsel %vm1011, %v1005, %v865
      %v1023 = vsel %vm1011, %v1006, %v867
      %v1024 = vsel %vm1011, %v1007, %v869
      %v1025 = vsel %vm1011, %v1008, %v871
      %v1026 = vsel %vm1011, %v1009, %v873
      %v1027 = vsel %vm1011, %v1010, %v875
      %v1028 = vld [vmem:[%s1] sm:$0xff]
      %v1029 = vld [vmem:[%s1 + $0x8] sm:$0xff]
      %v1030 = vld [vmem:[%s1 + $0x10] sm:$0xff]
      %v1031 = vld [vmem:[%s1 + $0x18] sm:$0xff]
      %v1032 = vld [vmem:[%s1 + $0x20] sm:$0xf]
      %vm1033 = vcmask 293888
      %v1035 = vsel %vm1033, %v1012, 0
      %v1038 = vsel %vm1033, %v1013, 0
      %v1041 = vsel %vm1033, %v1014, 0
      %v1044 = vsel %vm1033, %v1015, 0
      %v1047 = vsel %vm1033, %v1016, 0
      %v1050 = vsel %vm1033, %v1017, 0
      %v1053 = vsel %vm1033, %v1018, 0
      %v1056 = vsel %vm1033, %v1019, 0
      %v1059 = vsel %vm1033, %v1020, 0
      %v1062 = vsel %vm1033, %v1021, 0
      %v1065 = vsel %vm1033, %v1022, 0
      %v1068 = vsel %vm1033, %v1023, 0
      %v1071 = vsel %vm1033, %v1024, 0
      %v1074 = vsel %vm1033, %v1025, 0
      %v1077 = vsel %vm1033, %v1026, 0
      %v1080 = vsel %vm1033, %v1027, 0
      %vm1082 = vcmask 1043456
      %v1084 = vsel %vm1082, %v1032, 0
      %1086 = vmatprep.subr.mxu0 0.0
      %1087 = vmatpush1.msra.mxu0 0.0
      %1088 = vmatprep.subr.mxu0 0.0
      %1089 = vmatpush1.msra.mxu0 0.0
      %1090 = vmatprep.subr.mxu0 0.0
      %1091 = vmatpush1.msra.mxu0 0.0
      %1092 = vmatprep.subr.mxu0 0.0
      %1093 = vmatpush1.msra.mxu0 0.0
      %1094 = vmatprep.subr.mxu0 0.0
      %1095 = vmatpush1.msra.mxu0 0.0
      %1096 = vmatprep.subr.mxu0 0.0
      %1097 = vmatpush1.msra.mxu0 0.0
      %1098 = vmatprep.subr.mxu0 0.0
      %1099 = vmatpush1.msra.mxu0 0.0
      %1100 = vmatprep.subr.mxu0 0.0
      %1101 = vmatpush1.msra.mxu0 0.0
      %1102 = vmatprep.subr.mxu0 0.0
      %1103 = vmatpush1.msra.mxu0 0.0
      %1104 = vmatprep.subr.mxu0 0.0
      %1105 = vmatpush1.msra.mxu0 0.0
      %1106 = vmatprep.subr.mxu0 0.0
      %1107 = vmatpush1.msra.mxu0 0.0
      %1108 = vmatprep.subr.mxu0 0.0
      %1109 = vmatpush1.msra.mxu0 %v1084
      %1110 = vmatprep.subr.mxu0 0.0
      %1111 = vmatpush1.msra.mxu0 %v1031
      %1112 = vmatprep.subr.mxu0 0.0
      %1113 = vmatpush1.msra.mxu0 %v1030
      %1114 = vmatprep.subr.mxu0 0.0
      %1115 = vmatpush1.msra.mxu0 %v1029
      %1116 = vmatprep.subr.mxu0 0.0
      %1117 = vmatpush1.msra.mxu0 %v1028
      %1118 = vmatprep.subr.mxu0 0.0
      %1119 = vmatpush2.msra.mxu0 0.0
      %1120 = vmatprep.subr.mxu0 0.0
      %1121 = vmatpush2.msra.mxu0 0.0
      %1122 = vmatprep.subr.mxu0 0.0
      %1123 = vmatpush2.msra.mxu0 0.0
      %1124 = vmatprep.subr.mxu0 0.0
      %1125 = vmatpush2.msra.mxu0 0.0
      %1126 = vmatprep.subr.mxu0 0.0
      %1127 = vmatpush2.msra.mxu0 0.0
      %1128 = vmatprep.subr.mxu0 0.0
      %1129 = vmatpush2.msra.mxu0 0.0
      %1130 = vmatprep.subr.mxu0 0.0
      %1131 = vmatpush2.msra.mxu0 0.0
      %1132 = vmatprep.subr.mxu0 0.0
      %1133 = vmatpush2.msra.mxu0 0.0
      %1134 = vmatprep.subr.mxu0 0.0
      %1135 = vmatpush2.msra.mxu0 0.0
      %1136 = vmatprep.subr.mxu0 0.0
      %1137 = vmatpush2.msra.mxu0 0.0
      %1138 = vmatprep.subr.mxu0 0.0
      %1139 = vmatpush2.msra.mxu0 0.0
      %1140 = vmatprep.subr.mxu0 0.0
      %1141 = vmatpush2.msra.mxu0 0.0
      %1142 = vmatprep.subr.mxu0 0.0
      %1143 = vmatpush2.msra.mxu0 0.0
      %1144 = vmatprep.subr.mxu0 0.0
      %1145 = vmatpush2.msra.mxu0 0.0
      %1146 = vmatprep.subr.mxu0 0.0
      %1147 = vmatpush2.msra.mxu0 0.0
      %1148 = vmatprep.subr.mxu0 0.0
      %1149 = vmatpush2.msra.mxu0 0.0
      %1150 = vmatprep.mubr.f32.mxu0 0.0
      %1151 = vmatmul.mubr.f32.gmra.mxu0 %v1035
      %v1152 = vpop.f32.mrf.mxu0
      %v1153 = vadd.f32 0.0, %v1152
      %v1154 = vpop.f32.mrf.mxu0
      %1155 = vmatprep.mubr.f32.mxu0 0.0
      %1156 = vmatmul.mubr.f32.gmra.mxu0 %v1038
      %v1157 = vpop.f32.mrf.mxu0
      %v1158 = vadd.f32 0.0, %v1157
      %v1159 = vpop.f32.mrf.mxu0
      %1160 = vmatprep.mubr.f32.mxu0 0.0
      %1161 = vmatmul.mubr.f32.gmra.mxu0 %v1041
      %v1162 = vpop.f32.mrf.mxu0
      %v1163 = vadd.f32 0.0, %v1162
      %v1164 = vpop.f32.mrf.mxu0
      %1165 = vmatprep.mubr.f32.mxu0 0.0
      %1166 = vmatmul.mubr.f32.gmra.mxu0 %v1044
      %v1167 = vpop.f32.mrf.mxu0
      %v1168 = vadd.f32 0.0, %v1167
      %v1169 = vpop.f32.mrf.mxu0
      %1170 = vmatprep.mubr.f32.mxu0 0.0
      %1171 = vmatmul.mubr.f32.gmra.mxu0 %v1047
      %v1172 = vpop.f32.mrf.mxu0
      %v1173 = vadd.f32 0.0, %v1172
      %v1174 = vpop.f32.mrf.mxu0
      %1175 = vmatprep.mubr.f32.mxu0 0.0
      %1176 = vmatmul.mubr.f32.gmra.mxu0 %v1050
      %v1177 = vpop.f32.mrf.mxu0
      %v1178 = vadd.f32 0.0, %v1177
      %v1179 = vpop.f32.mrf.mxu0
      %1180 = vmatprep.mubr.f32.mxu0 0.0
      %1181 = vmatmul.mubr.f32.gmra.mxu0 %v1053
      %v1182 = vpop.f32.mrf.mxu0
      %v1183 = vadd.f32 0.0, %v1182
      %v1184 = vpop.f32.mrf.mxu0
      %1185 = vmatprep.mubr.f32.mxu0 0.0
      %1186 = vmatmul.mubr.f32.gmra.mxu0 %v1056
      %v1187 = vpop.f32.mrf.mxu0
      %v1188 = vadd.f32 0.0, %v1187
      %v1189 = vpop.f32.mrf.mxu0
      %1190 = vmatprep.mubr.f32.mxu0 0.0
      %1191 = vmatmul.mubr.f32.gmra.mxu0 %v1059
      %v1192 = vpop.f32.mrf.mxu0
      %v1193 = vadd.f32 0.0, %v1192
      %v1194 = vpop.f32.mrf.mxu0
      %1195 = vmatprep.mubr.f32.mxu0 0.0
      %1196 = vmatmul.mubr.f32.gmra.mxu0 %v1062
      %v1197 = vpop.f32.mrf.mxu0
      %v1198 = vadd.f32 0.0, %v1197
      %v1199 = vpop.f32.mrf.mxu0
      %1200 = vmatprep.mubr.f32.mxu0 0.0
      %1201 = vmatmul.mubr.f32.gmra.mxu0 %v1065
      %v1202 = vpop.f32.mrf.mxu0
      %v1203 = vadd.f32 0.0, %v1202
      %v1204 = vpop.f32.mrf.mxu0
      %1205 = vmatprep.mubr.f32.mxu0 0.0
      %1206 = vmatmul.mubr.f32.gmra.mxu0 %v1068
      %v1207 = vpop.f32.mrf.mxu0
      %v1208 = vadd.f32 0.0, %v1207
      %v1209 = vpop.f32.mrf.mxu0
      %1210 = vmatprep.mubr.f32.mxu0 0.0
      %1211 = vmatmul.mubr.f32.gmra.mxu0 %v1071
      %v1212 = vpop.f32.mrf.mxu0
      %v1213 = vadd.f32 0.0, %v1212
      %v1214 = vpop.f32.mrf.mxu0
      %1215 = vmatprep.mubr.f32.mxu0 0.0
      %1216 = vmatmul.mubr.f32.gmra.mxu0 %v1074
      %v1217 = vpop.f32.mrf.mxu0
      %v1218 = vadd.f32 0.0, %v1217
      %v1219 = vpop.f32.mrf.mxu0
      %1220 = vmatprep.mubr.f32.mxu0 0.0
      %1221 = vmatmul.mubr.f32.gmra.mxu0 %v1077
      %v1222 = vpop.f32.mrf.mxu0
      %v1223 = vadd.f32 0.0, %v1222
      %v1224 = vpop.f32.mrf.mxu0
      %1225 = vmatprep.mubr.f32.mxu0 0.0
      %1226 = vmatmul.mubr.f32.gmra.mxu0 %v1080
      %v1227 = vpop.f32.mrf.mxu0
      %v1228 = vadd.f32 0.0, %v1227
      %v1229 = vpop.f32.mrf.mxu0
      %1230 = vdwg.mxu0
      %v1231 = vld [vmem:[%s2] sm:$0xff]
      %v1232 = vld [vmem:[%s2 + $0x8] sm:$0xff]
      %v1233 = vld [vmem:[%s3] sm:$0x1]
      %v1235 = vlaneseq
      %v1236 = vshrl.u32 %v1235, 7
      %v1237 = vsub.s32 0, %v1236
      %v1238 = vrot.slane %v1233, %v1237
      %v1241 = vsel %vm943, %v1153, 0
      %v1244 = vsel %vm943, %v1158, 0
      %v1247 = vsel %vm943, %v1163, 0
      %v1250 = vsel %vm943, %v1168, 0
      %v1253 = vsel %vm943, %v1173, 0
      %v1256 = vsel %vm943, %v1178, 0
      %v1259 = vsel %vm943, %v1183, 0
      %v1262 = vsel %vm943, %v1188, 0
      %v1265 = vsel %vm943, %v1193, 0
      %v1268 = vsel %vm943, %v1198, 0
      %v1271 = vsel %vm943, %v1203, 0
      %v1274 = vsel %vm943, %v1208, 0
      %v1277 = vsel %vm943, %v1213, 0
      %v1280 = vsel %vm943, %v1218, 0
      %v1283 = vsel %vm943, %v1223, 0
      %v1286 = vsel %vm943, %v1228, 0
      %1288 = vmatprep.subr.mxu0 0.0
      %1289 = vmatpush1.msra.mxu0 0.0
      %1290 = vmatprep.subr.mxu0 0.0
      %1291 = vmatpush1.msra.mxu0 0.0
      %1292 = vmatprep.subr.mxu0 0.0
      %1293 = vmatpush1.msra.mxu0 0.0
      %1294 = vmatprep.subr.mxu0 0.0
      %1295 = vmatpush1.msra.mxu0 0.0
      %1296 = vmatprep.subr.mxu0 0.0
      %1297 = vmatpush1.msra.mxu0 0.0
      %1298 = vmatprep.subr.mxu0 0.0
      %1299 = vmatpush1.msra.mxu0 0.0
      %1300 = vmatprep.subr.mxu0 0.0
      %1301 = vmatpush1.msra.mxu0 0.0
      %1302 = vmatprep.subr.mxu0 0.0
      %1303 = vmatpush1.msra.mxu0 0.0
      %1304 = vmatprep.subr.mxu0 0.0
      %1305 = vmatpush1.msra.mxu0 0.0
      %1306 = vmatprep.subr.mxu0 0.0
      %1307 = vmatpush1.msra.mxu0 0.0
      %1308 = vmatprep.subr.mxu0 0.0
      %1309 = vmatpush1.msra.mxu0 0.0
      %1310 = vmatprep.subr.mxu0 0.0
      %1311 = vmatpush1.msra.mxu0 0.0
      %1312 = vmatprep.subr.mxu0 0.0
      %1313 = vmatpush1.msra.mxu0 0.0
      %1314 = vmatprep.subr.mxu0 0.0
      %1315 = vmatpush1.msra.mxu0 0.0
      %1316 = vmatprep.subr.mxu0 0.0
      %1317 = vmatpush1.msra.mxu0 %v1232
      %1318 = vmatprep.subr.mxu0 0.0
      %1319 = vmatpush1.msra.mxu0 %v1231
      %1320 = vmatprep.subr.mxu0 0.0
      %1321 = vmatpush2.msra.mxu0 0.0
      %1322 = vmatprep.subr.mxu0 0.0
      %1323 = vmatpush2.msra.mxu0 0.0
      %1324 = vmatprep.subr.mxu0 0.0
      %1325 = vmatpush2.msra.mxu0 0.0
      %1326 = vmatprep.subr.mxu0 0.0
      %1327 = vmatpush2.msra.mxu0 0.0
      %1328 = vmatprep.subr.mxu0 0.0
      %1329 = vmatpush2.msra.mxu0 0.0
      %1330 = vmatprep.subr.mxu0 0.0
      %1331 = vmatpush2.msra.mxu0 0.0
      %1332 = vmatprep.subr.mxu0 0.0
      %1333 = vmatpush2.msra.mxu0 0.0
      %1334 = vmatprep.subr.mxu0 0.0
      %1335 = vmatpush2.msra.mxu0 0.0
      %1336 = vmatprep.subr.mxu0 0.0
      %1337 = vmatpush2.msra.mxu0 0.0
      %1338 = vmatprep.subr.mxu0 0.0
      %1339 = vmatpush2.msra.mxu0 0.0
      %1340 = vmatprep.subr.mxu0 0.0
      %1341 = vmatpush2.msra.mxu0 0.0
      %1342 = vmatprep.subr.mxu0 0.0
      %1343 = vmatpush2.msra.mxu0 0.0
      %1344 = vmatprep.subr.mxu0 0.0
      %1345 = vmatpush2.msra.mxu0 0.0
      %1346 = vmatprep.subr.mxu0 0.0
      %1347 = vmatpush2.msra.mxu0 0.0
      %1348 = vmatprep.subr.mxu0 0.0
      %1349 = vmatpush2.msra.mxu0 0.0
      %1350 = vmatprep.subr.mxu0 0.0
      %1351 = vmatpush2.msra.mxu0 0.0
      %1352 = vmatprep.mubr.f32.mxu0 0.0
      %1353 = vmatmul.mubr.f32.gmra.mxu0 %v1241
      %v1354 = vpop.f32.mrf.mxu0
      %v1355 = vadd.f32 %v1238, %v1354
      %v1356 = vpop.f32.mrf.mxu0
      %1357 = vmatprep.mubr.f32.mxu0 0.0
      %1358 = vmatmul.mubr.f32.gmra.mxu0 %v1244
      %v1359 = vpop.f32.mrf.mxu0
      %v1360 = vadd.f32 %v1238, %v1359
      %v1361 = vpop.f32.mrf.mxu0
      %1362 = vmatprep.mubr.f32.mxu0 0.0
      %1363 = vmatmul.mubr.f32.gmra.mxu0 %v1247
      %v1364 = vpop.f32.mrf.mxu0
      %v1365 = vadd.f32 %v1238, %v1364
      %v1366 = vpop.f32.mrf.mxu0
      %1367 = vmatprep.mubr.f32.mxu0 0.0
      %1368 = vmatmul.mubr.f32.gmra.mxu0 %v1250
      %v1369 = vpop.f32.mrf.mxu0
      %v1370 = vadd.f32 %v1238, %v1369
      %v1371 = vpop.f32.mrf.mxu0
      %1372 = vmatprep.mubr.f32.mxu0 0.0
      %1373 = vmatmul.mubr.f32.gmra.mxu0 %v1253
      %v1374 = vpop.f32.mrf.mxu0
      %v1375 = vadd.f32 %v1238, %v1374
      %v1376 = vpop.f32.mrf.mxu0
      %1377 = vmatprep.mubr.f32.mxu0 0.0
      %1378 = vmatmul.mubr.f32.gmra.mxu0 %v1256
      %v1379 = vpop.f32.mrf.mxu0
      %v1380 = vadd.f32 %v1238, %v1379
      %v1381 = vpop.f32.mrf.mxu0
      %1382 = vmatprep.mubr.f32.mxu0 0.0
      %1383 = vmatmul.mubr.f32.gmra.mxu0 %v1259
      %v1384 = vpop.f32.mrf.mxu0
      %v1385 = vadd.f32 %v1238, %v1384
      %v1386 = vpop.f32.mrf.mxu0
      %1387 = vmatprep.mubr.f32.mxu0 0.0
      %1388 = vmatmul.mubr.f32.gmra.mxu0 %v1262
      %v1389 = vpop.f32.mrf.mxu0
      %v1390 = vadd.f32 %v1238, %v1389
      %v1391 = vpop.f32.mrf.mxu0
      %1392 = vmatprep.mubr.f32.mxu0 0.0
      %1393 = vmatmul.mubr.f32.gmra.mxu0 %v1265
      %v1394 = vpop.f32.mrf.mxu0
      %v1395 = vadd.f32 %v1238, %v1394
      %v1396 = vpop.f32.mrf.mxu0
      %1397 = vmatprep.mubr.f32.mxu0 0.0
      %1398 = vmatmul.mubr.f32.gmra.mxu0 %v1268
      %v1399 = vpop.f32.mrf.mxu0
      %v1400 = vadd.f32 %v1238, %v1399
      %v1401 = vpop.f32.mrf.mxu0
      %1402 = vmatprep.mubr.f32.mxu0 0.0
      %1403 = vmatmul.mubr.f32.gmra.mxu0 %v1271
      %v1404 = vpop.f32.mrf.mxu0
      %v1405 = vadd.f32 %v1238, %v1404
      %v1406 = vpop.f32.mrf.mxu0
      %1407 = vmatprep.mubr.f32.mxu0 0.0
      %1408 = vmatmul.mubr.f32.gmra.mxu0 %v1274
      %v1409 = vpop.f32.mrf.mxu0
      %v1410 = vadd.f32 %v1238, %v1409
      %v1411 = vpop.f32.mrf.mxu0
      %1412 = vmatprep.mubr.f32.mxu0 0.0
      %1413 = vmatmul.mubr.f32.gmra.mxu0 %v1277
      %v1414 = vpop.f32.mrf.mxu0
      %v1415 = vadd.f32 %v1238, %v1414
      %v1416 = vpop.f32.mrf.mxu0
      %1417 = vmatprep.mubr.f32.mxu0 0.0
      %1418 = vmatmul.mubr.f32.gmra.mxu0 %v1280
      %v1419 = vpop.f32.mrf.mxu0
      %v1420 = vadd.f32 %v1238, %v1419
      %v1421 = vpop.f32.mrf.mxu0
      %1422 = vmatprep.mubr.f32.mxu0 0.0
      %1423 = vmatmul.mubr.f32.gmra.mxu0 %v1283
      %v1424 = vpop.f32.mrf.mxu0
      %v1425 = vadd.f32 %v1238, %v1424
      %v1426 = vpop.f32.mrf.mxu0
      %1427 = vmatprep.mubr.f32.mxu0 0.0
      %1428 = vmatmul.mubr.f32.gmra.mxu0 %v1286
      %v1429 = vpop.f32.mrf.mxu0
      %v1430 = vadd.f32 %v1238, %v1429
      %v1431 = vpop.f32.mrf.mxu0
      %1432 = vdwg.mxu0
      %v1433 = vadd.f32 %v1355, %v299
      %v1434 = vadd.f32 %v1360, %v300
      %v1435 = vadd.f32 %v1365, %v301
      %v1436 = vadd.f32 %v1370, %v302
      %v1437 = vadd.f32 %v1375, %v303
      %v1438 = vadd.f32 %v1380, %v304
      %v1439 = vadd.f32 %v1385, %v305
      %v1440 = vadd.f32 %v1390, %v306
      %v1441 = vadd.f32 %v1395, %v307
      %v1442 = vadd.f32 %v1400, %v308
      %v1443 = vadd.f32 %v1405, %v309
      %v1444 = vadd.f32 %v1410, %v310
      %v1445 = vadd.f32 %v1415, %v311
      %v1446 = vadd.f32 %v1420, %v312
      %v1447 = vadd.f32 %v1425, %v313
      %v1448 = vadd.f32 %v1430, %v314
      %1449 = vst.msk [vmem:[%s233] sm:$0xff] %vm892, %v1433
      %1450 = vst.msk [vmem:[%s233 + $0x8] sm:$0xff] %vm892, %v1434
      %1451 = vst.msk [vmem:[%s233 + $0x10] sm:$0xff] %vm892, %v1435
      %1452 = vst.msk [vmem:[%s233 + $0x18] sm:$0xff] %vm892, %v1436
      %1453 = vst.msk [vmem:[%s233 + $0x20] sm:$0xff] %vm892, %v1437
      %1454 = vst.msk [vmem:[%s233 + $0x28] sm:$0xff] %vm892, %v1438
      %1455 = vst.msk [vmem:[%s233 + $0x30] sm:$0xff] %vm892, %v1439
      %1456 = vst.msk [vmem:[%s233 + $0x38] sm:$0xff] %vm892, %v1440
      %1457 = vst.msk [vmem:[%s233 + $0x40] sm:$0xff] %vm892, %v1441
      %1458 = vst.msk [vmem:[%s233 + $0x48] sm:$0xff] %vm892, %v1442
      %1459 = vst.msk [vmem:[%s233 + $0x50] sm:$0xff] %vm892, %v1443
      %1460 = vst.msk [vmem:[%s233 + $0x58] sm:$0xff] %vm892, %v1444
      %1461 = vst.msk [vmem:[%s233 + $0x60] sm:$0xff] %vm892, %v1445
      %1462 = vst.msk [vmem:[%s233 + $0x68] sm:$0xff] %vm892, %v1446
      %1463 = vst.msk [vmem:[%s233 + $0x70] sm:$0xff] %vm892, %v1447
      %1464 = vst.msk [vmem:[%s233 + $0x78] sm:$0xff] %vm892, %v1448
      %p1465 = scmp.lt.s32.totalorder %s19, 1
      %s1466 = scalar_select %p1465, %s19, 1
      %p1467 = scmp.lt.s32.totalorder %s20, 1
      %s1468 = scalar_select %p1467, %s20, 1
      %s1469 = smul.addr %s1468, 16
      %s1470 = smul.addr %s1466, 32
      %s1471 = sadd.s32 %s1469, %s1470
      %s1472 = smul.addr %s1471, 8
      %s1473 = scalar_lea.vmem %s4, %s1472
      // Predicated region
      $region37: #{block_forward.3} parent=35 // pred_check
        %p1474 = pneg %p138
      $region38: #{block_forward.3} parent=35 // pred_check_branch
        %1476 = sbr.rel (%p1474) target = $region40
      $region39: #{block_forward.3} parent=35 // pred_region
        _
      $region40: #{block_forward.3} parent=35 // pred_fallthru
        _
    $region36: #{block_forward.3} parent=5 // pred_fallthru
      _
    %p1477 = scmp.le.s32.totalorder 2, %s10
    // Predicated region
    $region41: #{block_forward.3} parent=5 // pred_check
      %p1478 = pneg %p1477
    $region42: #{block_forward.3} parent=5 // pred_check_branch
      %1480 = sbr.rel (%p1478) target = $region44
    $region43: #{block_forward.3} parent=5 // pred_region
      %s1481 = ssub.s32 %s10, 2
      // Predicated region
      $region45: #{block_forward.3} parent=43 // pred_check
        %p1482 = pneg %p144
      $region46: #{block_forward.3} parent=43 // pred_check_branch
        %1484 = sbr.rel (%p1482) target = $region48
      $region47: #{block_forward.3} parent=43 // pred_region
        %p1485 = scmp.lt.s32.totalorder %s21, 1
        %s1486 = scalar_select %p1485, %s21, 1
        %p1487 = scmp.lt.s32.totalorder %s22, 1
        %s1488 = scalar_select %p1487, %s22, 1
        %s1489 = smul.addr %s1488, 16
        %s1490 = smul.addr %s1486, 32
        %s1491 = sadd.s32 %s1489, %s1490
        %s1492 = smul.addr %s1491, 8
        %s1493 = scalar_lea.vmem %s4, %s1492
      $region48: #{block_forward.3} parent=43 // pred_fallthru
        _
    $region44: #{block_forward.3} parent=5 // pred_fallthru
      _
  $region6: #{block_forward.3} parent=0 // loop_footer
    %s14 = sadd.s32 1, %s10
  $region7: #{block_forward.3} parent=0 // loop_footer_branch
    %9 = sbr.rel target = $region3
  $region8: #{block_forward.3} parent=0 // loop_exit
    _

</llo_original>
